<compile_context>
chip_gen: v7x
topology: tpu7x:2x2x1
jax: 0.10.0
libtpu: 0.0.40
codegen_flags: <defaults>
</compile_context>

<pallas_src>
import functools

import numpy as np
import jax
import jax.numpy as jnp
from jax import lax
from jax.experimental import pallas as pl
from jax.experimental.pallas import tpu as pltpu

EPS = 1e-5
NEG_SLOPE = 0.2


def _leaky(y):
    # exact for NEG_SLOPE in (0, 1); one mul + one max (no compare/select pair)
    return jnp.maximum(y, NEG_SLOPE * y)


# ----------------------------- Pallas kernel -------------------------------
def generator_kernel(x_ref,
                     w0_ref, p0_ref, g0_ref, be0_ref,
                     m1_ref, p1_ref, g1_ref, be1_ref,
                     m2_ref, p2_ref, g2_ref, be2_ref,
                     m3_ref, p3_ref, g3_ref, be3_ref,
                     out_ref, *, beta):
    x = x_ref[...]  # (B, L) float32, flattened channels-first activations

    def batchnorm(y, p_ref, g_ref, be_ref):
        # training-mode BatchNorm1d: per-channel batch statistics, biased variance.
        # p_ref is a (CT, CT) block-averaging matrix: colsum @ P == per-channel mean,
        # broadcast back to every column of that channel. Both stat rows go through
        # a single fused (2, CT) @ (CT, CT) matmul.
        stats = jnp.concatenate(
            [jnp.sum(y, axis=0, keepdims=True),
             jnp.sum(y * y, axis=0, keepdims=True)], axis=0)          # (2, CT)
        red = jnp.dot(stats, p_ref[...], preferred_element_type=jnp.float32)
        mu = red[0:1, :]
        ex2 = red[1:2, :]
        # NOTE: E[x^2]-E[x]^2 is cancellation-prone at large activation scales;
        # fine at these magnitudes.
        var = ex2 - mu * mu
        inv = lax.rsqrt(var + EPS)
        return (y - mu) * inv * g_ref[...] + be_ref[...]

    # Layer0: Conv1d(1, 1, K, padding='same') as an (L, L) Toeplitz matmul.
    # Conv bias omitted: a per-channel constant before training-mode BN is exactly
    # cancelled by the batch-mean subtraction (variance unchanged).
    h = jnp.dot(x, w0_ref[...], preferred_element_type=jnp.float32)
    h = _leaky(batchnorm(h, p0_ref, g0_ref, be0_ref))

    # x.view(B, 8, L//8) is a pure row-major reinterpretation of the flat (B, L)
    # layout, so no data movement is needed before the transposed convs.
    h = jnp.dot(h, m1_ref[...], preferred_element_type=jnp.float32)
    h = _leaky(batchnorm(h, p1_ref, g1_ref, be1_ref))

    h = jnp.dot(h, m2_ref[...], preferred_element_type=jnp.float32)
    h = _leaky(batchnorm(h, p2_ref, g2_ref, be2_ref))

    h = jnp.dot(h, m3_ref[...], preferred_element_type=jnp.float32)
    # Funct alpha is pre-folded into g3/be3 at setup time; beta is a compile-time const.
    h = batchnorm(h, p3_ref, g3_ref, be3_ref)
    out_ref[...] = beta * jnp.tanh(h)


# --------------------- parameter setup / conv lowering ---------------------
def _conv1d_same_toeplitz(w, L):
    """Conv1d(1,1,K,padding='same') as an (L, L) matrix (out = x @ T)."""
    K = w.shape[0]
    left = (K - 1) // 2  # PyTorch 'same': pad left=(K-1)//2, right=K-1-left
    T = np.zeros((L, L), np.float32)
    for i in range(L):
        for o in range(L):
            j = i - o + left
            if 0 <= j < K:
                T[i, o] = w[j]
    return T


def _convT_matrix(w, Lin, stride=2, padding=3, output_padding=1):
    """ConvTranspose1d(Cin,Cout,K) as a (Cin*Lin, Cout*Lout) matrix."""
    Cin, Cout, K = w.shape
    Lout = (Lin - 1) * stride - 2 * padding + K + output_padding
    M = np.zeros((Cin * Lin, Cout * Lout), np.float32)
    for ci in range(Cin):
        for i in range(Lin):
            for k in range(K):
                t = i * stride - padding + k
                if 0 <= t < Lout:
                    M[ci * Lin + i, np.arange(Cout) * Lout + t] += w[ci, :, k]
    return M, Lout


def _bn_avg_matrix(C, T, B):
    """Block matrix so that (colsum @ P)[c*T+t] = mean over (batch, length) of channel c."""
    return np.kron(np.eye(C, dtype=np.float32),
                   np.ones((T, T), np.float32)) / float(B * T)


def make_params(key, kernel_size=32):
    ks = jax.random.split(key, 16)
    p = {}
    p['w0'] = 0.3 * jax.random.normal(ks[0], (kernel_size,), jnp.float32)
    p['b0'] = 0.1 * jax.random.normal(ks[1], (1,), jnp.float32)
    p['w1'] = 0.3 * jax.random.normal(ks[2], (8, 4, 7), jnp.float32)   # ConvT1d(8,4,7)
    p['b1'] = 0.1 * jax.random.normal(ks[3], (4,), jnp.float32)
    p['w2'] = 0.3 * jax.random.normal(ks[4], (4, 2, 7), jnp.float32)   # ConvT1d(4,2,7)
    p['b2'] = 0.1 * jax.random.normal(ks[5], (2,), jnp.float32)
    p['w3'] = 0.3 * jax.random.normal(ks[6], (2, 1, 7), jnp.float32)   # ConvT1d(2,1,7)
    p['b3'] = 0.1 * jax.random.normal(ks[7], (1,), jnp.float32)
    # BatchNorm affine params (nontrivial deterministic values)
    p['g0'] = 1.0 + 0.1 * jax.random.normal(ks[8], (1,), jnp.float32)
    p['be0'] = 0.1 * jax.random.normal(ks[9], (1,), jnp.float32)
    p['g1'] = 1.0 + 0.1 * jax.random.normal(ks[10], (4,), jnp.float32)
    p['be1'] = 0.1 * jax.random.normal(ks[11], (4,), jnp.float32)
    p['g2'] = 1.0 + 0.1 * jax.random.normal(ks[12], (2,), jnp.float32)
    p['be2'] = 0.1 * jax.random.normal(ks[13], (2,), jnp.float32)
    p['g3'] = 1.0 + 0.1 * jax.random.normal(ks[14], (1,), jnp.float32)
    p['be3'] = 0.1 * jax.random.normal(ks[15], (1,), jnp.float32)
    # Funct defaults: alpha = beta = 0.5 (fixed constants; folded at setup time)
    p['alpha'] = jnp.float32(0.5)
    p['beta'] = jnp.float32(0.5)
    return p


def generator_forward(x, params):
    B, L = x.shape
    assert L % 8 == 0
    p = {k: np.asarray(v, np.float32) for k, v in params.items()}
    alpha = float(p['alpha'])
    beta = float(p['beta'])

    # Layer0 (Conv1d 'same', 1 channel). Conv biases are dropped everywhere: they are
    # exactly cancelled by the training-mode BatchNorm mean subtraction.
    W0 = _conv1d_same_toeplitz(p['w0'], L)
    P0 = _bn_avg_matrix(1, L, B)
    g0r = np.repeat(p['g0'], L)[None, :]
    be0r = np.repeat(p['be0'], L)[None, :]

    Lin = L // 8
    M1, L1 = _convT_matrix(p['w1'], Lin)
    P1 = _bn_avg_matrix(4, L1, B)
    g1r = np.repeat(p['g1'], L1)[None, :]
    be1r = np.repeat(p['be1'], L1)[None, :]

    M2, L2 = _convT_matrix(p['w2'], L1)
    P2 = _bn_avg_matrix(2, L2, B)
    g2r = np.repeat(p['g2'], L2)[None, :]
    be2r = np.repeat(p['be2'], L2)[None, :]

    M3, L3 = _convT_matrix(p['w3'], L2)
    P3 = _bn_avg_matrix(1, L3, B)
    # Fold Funct's alpha into BN3's affine (beta*tanh(alpha*(s*x+b)) == beta*tanh(a*s*x + a*b)).
    g3r = alpha * np.repeat(p['g3'], L3)[None, :]
    be3r = alpha * np.repeat(p['be3'], L3)[None, :]

    vmem_args = [x,
                 W0, P0, g0r, be0r,
                 M1, P1, g1r, be1r,
                 M2, P2, g2r, be2r,
                 M3, P3, g3r, be3r]
    # NOTE(v5e): the W0/M*/P* matrices could be cast to bf16 (MXU-native) with f32
    # accumulation; kept f32 here since the demo sizes are latency- not MXU-bound.
    vmem_args = [jnp.asarray(a, jnp.float32) for a in vmem_args]

    vmem = pl.BlockSpec(memory_space=pltpu.MemorySpace.VMEM)
    out = pl.pallas_call(
        functools.partial(generator_kernel, beta=beta),
        out_shape=jax.ShapeDtypeStruct((B, L3), jnp.float32),
        in_specs=[vmem] * len(vmem_args),
        out_specs=vmem,
    )(*vmem_args)
    return out


# ------------------------- pure numpy reference -----------------------------
def _ref_conv1d_same(x, w, b):
    B, _, L = x.shape
    K = w.shape[-1]
    left = (K - 1) // 2
    right = K - 1 - left
    xp = np.pad(x, ((0, 0), (0, 0), (left, right)))
    out = np.zeros((B, 1, L), np.float32)
    for n in range(B):
        for o in range(L):
            out[n, 0, o] = b[0] + np.dot(xp[n, 0, o:o + K], w[0, 0])
    return out


def _ref_convT(x, w, b, stride=2, padding=3, output_padding=1):
    B, Cin, Lin = x.shape
    _, Cout, K = w.shape
    Lfull = (Lin - 1) * stride + K
    full = np.zeros((B, Cout, Lfull), np.float32)
    for n in range(B):
        for ci in range(Cin):
            for i in range(Lin):
                full[n, :, i * stride:i * stride + K] += x[n, ci, i] * w[ci, :, :]
    Lout = Lfull - 2 * padding + output_padding
    return full[:, :, padding:padding + Lout] + b[None, :, None]


def _ref_bn(x, g, be):
    mu = x.mean(axis=(0, 2), keepdims=True)
    var = x.var(axis=(0, 2), keepdims=True)  # biased
    return (x - mu) / np.sqrt(var + EPS) * g[None, :, None] + be[None, :, None]


def _ref_leaky(x):
    return np.where(x >= 0, x, NEG_SLOPE * x).astype(np.float32)


def reference_forward(x_np, params):
    p = {k: np.asarray(v, np.float32) for k, v in params.items()}
    B, L = x_np.shape
    h = x_np.reshape(B, 1, L).astype(np.float32)
    h = _ref_conv1d_same(h, p['w0'].reshape(1, 1, -1), p['b0'])
    h = _ref_leaky(_ref_bn(h, p['g0'], p['be0']))
    h = h.reshape(B, 8, L // 8)
    h = _ref_leaky(_ref_bn(_ref_convT(h, p['w1'], p['b1']), p['g1'], p['be1']))
    h = _ref_leaky(_ref_bn(_ref_convT(h, p['w2'], p['b2']), p['g2'], p['be2']))
    h = _ref_bn(_ref_convT(h, p['w3'], p['b3']), p['g3'], p['be3'])
    h = np.squeeze(h)
    return p['beta'] * np.tanh(p['alpha'] * h)


# --------------------------------- main -------------------------------------
if __name__ == "__main__":
    # batch=8 fills all 8 sublanes; L=128 makes every layer's C*L a full 128-lane vreg
    # and the output lane-dense (unmasked stores). Layer0 kernel=32 as in the module.
    B, L, K = 8, 128, 32
    key = jax.random.PRNGKey(0)
    kx, kp = jax.random.split(key)
    x = jax.random.normal(kx, (B, L), jnp.float32)
    params = make_params(kp, kernel_size=K)

    out = generator_forward(x, params)
    out = jax.block_until_ready(out)

    ref = reference_forward(np.asarray(x), params)
    np.testing.assert_allclose(np.asarray(out), ref, rtol=1e-3, atol=1e-4)
    print("KERNEL_OK")
</pallas_src>

<mosaic_0001>
module attributes {stable_mosaic.version = 11 : i64} {
  func.func @generator_kernel(%arg0: memref<8x128xf32, #tpu.memory_space<vmem>>, %arg1: memref<128x128xf32, #tpu.memory_space<vmem>>, %arg2: memref<128x128xf32, #tpu.memory_space<vmem>>, %arg3: memref<1x128xf32, #tpu.memory_space<vmem>>, %arg4: memref<1x128xf32, #tpu.memory_space<vmem>>, %arg5: memref<128x128xf32, #tpu.memory_space<vmem>>, %arg6: memref<128x128xf32, #tpu.memory_space<vmem>>, %arg7: memref<1x128xf32, #tpu.memory_space<vmem>>, %arg8: memref<1x128xf32, #tpu.memory_space<vmem>>, %arg9: memref<128x128xf32, #tpu.memory_space<vmem>>, %arg10: memref<128x128xf32, #tpu.memory_space<vmem>>, %arg11: memref<1x128xf32, #tpu.memory_space<vmem>>, %arg12: memref<1x128xf32, #tpu.memory_space<vmem>>, %arg13: memref<128x128xf32, #tpu.memory_space<vmem>>, %arg14: memref<128x128xf32, #tpu.memory_space<vmem>>, %arg15: memref<1x128xf32, #tpu.memory_space<vmem>>, %arg16: memref<1x128xf32, #tpu.memory_space<vmem>>, %arg17: memref<8x128xf32, #tpu.memory_space<vmem>>) attributes {dimension_semantics = [], scalar_prefetch = 0 : i64, scratch_operands = 0 : i64, tpu.core_type = #tpu.core_type<tc>} {
    %c0 = arith.constant 0 : index
    %c0_0 = arith.constant 0 : index
    %0 = vector.load %arg0[%c0, %c0_0] : memref<8x128xf32, #tpu.memory_space<vmem>>, vector<8x128xf32>
    %c0_1 = arith.constant 0 : index
    %c0_2 = arith.constant 0 : index
    %1 = vector.load %arg1[%c0_1, %c0_2] : memref<128x128xf32, #tpu.memory_space<vmem>>, vector<128x128xf32>
    %cst = arith.constant dense<0.000000e+00> : vector<8x128xf32>
    %2 = tpu.matmul %0, %1, %cst {dimension_numbers = #tpu.dot_dimension_numbers<[1], [0], [0], [1], [0, 0, 1, 1], [], []>} : vector<8x128xf32>, vector<128x128xf32>, vector<8x128xf32> -> vector<8x128xf32>
    %cst_3 = arith.constant dense<0.000000e+00> : vector<128xf32>
    %3 = vector.multi_reduction <add>, %2, %cst_3 [0] : vector<8x128xf32> to vector<128xf32>
    %4 = vector.shape_cast %3 : vector<128xf32> to vector<1x128xf32>
    %5 = arith.mulf %2, %2 : vector<8x128xf32>
    %cst_4 = arith.constant dense<0.000000e+00> : vector<128xf32>
    %6 = vector.multi_reduction <add>, %5, %cst_4 [0] : vector<8x128xf32> to vector<128xf32>
    %7 = vector.shape_cast %6 : vector<128xf32> to vector<1x128xf32>
    %8 = tpu.concatenate %4, %7 in 0 : vector<1x128xf32>, vector<1x128xf32> -> vector<2x128xf32>
    %c0_5 = arith.constant 0 : index
    %c0_6 = arith.constant 0 : index
    %9 = vector.load %arg2[%c0_5, %c0_6] : memref<128x128xf32, #tpu.memory_space<vmem>>, vector<128x128xf32>
    %cst_7 = arith.constant dense<0.000000e+00> : vector<2x128xf32>
    %10 = tpu.matmul %8, %9, %cst_7 {dimension_numbers = #tpu.dot_dimension_numbers<[1], [0], [0], [1], [0, 0, 1, 1], [], []>} : vector<2x128xf32>, vector<128x128xf32>, vector<2x128xf32> -> vector<2x128xf32>
    %11 = vector.extract_strided_slice %10 {offsets = [0, 0], sizes = [1, 128], strides = [1, 1]} : vector<2x128xf32> to vector<1x128xf32>
    %12 = vector.extract_strided_slice %10 {offsets = [1, 0], sizes = [1, 128], strides = [1, 1]} : vector<2x128xf32> to vector<1x128xf32>
    %13 = arith.mulf %11, %11 : vector<1x128xf32>
    %14 = arith.subf %12, %13 : vector<1x128xf32>
    %cst_8 = arith.constant 9.99999974E-6 : f32
    %15 = vector.broadcast %cst_8 : f32 to vector<1x128xf32>
    %16 = arith.addf %14, %15 : vector<1x128xf32>
    %17 = math.rsqrt %16 : vector<1x128xf32>
    %18 = vector.broadcast %11 : vector<1x128xf32> to vector<8x128xf32>
    %19 = arith.subf %2, %18 : vector<8x128xf32>
    %20 = vector.broadcast %17 : vector<1x128xf32> to vector<8x128xf32>
    %21 = arith.mulf %19, %20 : vector<8x128xf32>
    %c0_9 = arith.constant 0 : index
    %c0_10 = arith.constant 0 : index
    %22 = vector.load %arg3[%c0_9, %c0_10] : memref<1x128xf32, #tpu.memory_space<vmem>>, vector<1x128xf32>
    %23 = vector.broadcast %22 : vector<1x128xf32> to vector<8x128xf32>
    %24 = arith.mulf %21, %23 : vector<8x128xf32>
    %c0_11 = arith.constant 0 : index
    %c0_12 = arith.constant 0 : index
    %25 = vector.load %arg4[%c0_11, %c0_12] : memref<1x128xf32, #tpu.memory_space<vmem>>, vector<1x128xf32>
    %26 = vector.broadcast %25 : vector<1x128xf32> to vector<8x128xf32>
    %27 = arith.addf %24, %26 : vector<8x128xf32>
    %cst_13 = arith.constant 2.000000e-01 : f32
    %28 = vector.broadcast %cst_13 : f32 to vector<8x128xf32>
    %29 = arith.mulf %28, %27 : vector<8x128xf32>
    %30 = arith.maximumf %27, %29 : vector<8x128xf32>
    %c0_14 = arith.constant 0 : index
    %c0_15 = arith.constant 0 : index
    %31 = vector.load %arg5[%c0_14, %c0_15] : memref<128x128xf32, #tpu.memory_space<vmem>>, vector<128x128xf32>
    %cst_16 = arith.constant dense<0.000000e+00> : vector<8x128xf32>
    %32 = tpu.matmul %30, %31, %cst_16 {dimension_numbers = #tpu.dot_dimension_numbers<[1], [0], [0], [1], [0, 0, 1, 1], [], []>} : vector<8x128xf32>, vector<128x128xf32>, vector<8x128xf32> -> vector<8x128xf32>
    %cst_17 = arith.constant dense<0.000000e+00> : vector<128xf32>
    %33 = vector.multi_reduction <add>, %32, %cst_17 [0] : vector<8x128xf32> to vector<128xf32>
    %34 = vector.shape_cast %33 : vector<128xf32> to vector<1x128xf32>
    %35 = arith.mulf %32, %32 : vector<8x128xf32>
    %cst_18 = arith.constant dense<0.000000e+00> : vector<128xf32>
    %36 = vector.multi_reduction <add>, %35, %cst_18 [0] : vector<8x128xf32> to vector<128xf32>
    %37 = vector.shape_cast %36 : vector<128xf32> to vector<1x128xf32>
    %38 = tpu.concatenate %34, %37 in 0 : vector<1x128xf32>, vector<1x128xf32> -> vector<2x128xf32>
    %c0_19 = arith.constant 0 : index
    %c0_20 = arith.constant 0 : index
    %39 = vector.load %arg6[%c0_19, %c0_20] : memref<128x128xf32, #tpu.memory_space<vmem>>, vector<128x128xf32>
    %cst_21 = arith.constant dense<0.000000e+00> : vector<2x128xf32>
    %40 = tpu.matmul %38, %39, %cst_21 {dimension_numbers = #tpu.dot_dimension_numbers<[1], [0], [0], [1], [0, 0, 1, 1], [], []>} : vector<2x128xf32>, vector<128x128xf32>, vector<2x128xf32> -> vector<2x128xf32>
    %41 = vector.extract_strided_slice %40 {offsets = [0, 0], sizes = [1, 128], strides = [1, 1]} : vector<2x128xf32> to vector<1x128xf32>
    %42 = vector.extract_strided_slice %40 {offsets = [1, 0], sizes = [1, 128], strides = [1, 1]} : vector<2x128xf32> to vector<1x128xf32>
    %43 = arith.mulf %41, %41 : vector<1x128xf32>
    %44 = arith.subf %42, %43 : vector<1x128xf32>
    %cst_22 = arith.constant 9.99999974E-6 : f32
    %45 = vector.broadcast %cst_22 : f32 to vector<1x128xf32>
    %46 = arith.addf %44, %45 : vector<1x128xf32>
    %47 = math.rsqrt %46 : vector<1x128xf32>
    %48 = vector.broadcast %41 : vector<1x128xf32> to vector<8x128xf32>
    %49 = arith.subf %32, %48 : vector<8x128xf32>
    %50 = vector.broadcast %47 : vector<1x128xf32> to vector<8x128xf32>
    %51 = arith.mulf %49, %50 : vector<8x128xf32>
    %c0_23 = arith.constant 0 : index
    %c0_24 = arith.constant 0 : index
    %52 = vector.load %arg7[%c0_23, %c0_24] : memref<1x128xf32, #tpu.memory_space<vmem>>, vector<1x128xf32>
    %53 = vector.broadcast %52 : vector<1x128xf32> to vector<8x128xf32>
    %54 = arith.mulf %51, %53 : vector<8x128xf32>
    %c0_25 = arith.constant 0 : index
    %c0_26 = arith.constant 0 : index
    %55 = vector.load %arg8[%c0_25, %c0_26] : memref<1x128xf32, #tpu.memory_space<vmem>>, vector<1x128xf32>
    %56 = vector.broadcast %55 : vector<1x128xf32> to vector<8x128xf32>
    %57 = arith.addf %54, %56 : vector<8x128xf32>
    %cst_27 = arith.constant 2.000000e-01 : f32
    %58 = vector.broadcast %cst_27 : f32 to vector<8x128xf32>
    %59 = arith.mulf %58, %57 : vector<8x128xf32>
    %60 = arith.maximumf %57, %59 : vector<8x128xf32>
    %c0_28 = arith.constant 0 : index
    %c0_29 = arith.constant 0 : index
    %61 = vector.load %arg9[%c0_28, %c0_29] : memref<128x128xf32, #tpu.memory_space<vmem>>, vector<128x128xf32>
    %cst_30 = arith.constant dense<0.000000e+00> : vector<8x128xf32>
    %62 = tpu.matmul %60, %61, %cst_30 {dimension_numbers = #tpu.dot_dimension_numbers<[1], [0], [0], [1], [0, 0, 1, 1], [], []>} : vector<8x128xf32>, vector<128x128xf32>, vector<8x128xf32> -> vector<8x128xf32>
    %cst_31 = arith.constant dense<0.000000e+00> : vector<128xf32>
    %63 = vector.multi_reduction <add>, %62, %cst_31 [0] : vector<8x128xf32> to vector<128xf32>
    %64 = vector.shape_cast %63 : vector<128xf32> to vector<1x128xf32>
    %65 = arith.mulf %62, %62 : vector<8x128xf32>
    %cst_32 = arith.constant dense<0.000000e+00> : vector<128xf32>
    %66 = vector.multi_reduction <add>, %65, %cst_32 [0] : vector<8x128xf32> to vector<128xf32>
    %67 = vector.shape_cast %66 : vector<128xf32> to vector<1x128xf32>
    %68 = tpu.concatenate %64, %67 in 0 : vector<1x128xf32>, vector<1x128xf32> -> vector<2x128xf32>
    %c0_33 = arith.constant 0 : index
    %c0_34 = arith.constant 0 : index
    %69 = vector.load %arg10[%c0_33, %c0_34] : memref<128x128xf32, #tpu.memory_space<vmem>>, vector<128x128xf32>
    %cst_35 = arith.constant dense<0.000000e+00> : vector<2x128xf32>
    %70 = tpu.matmul %68, %69, %cst_35 {dimension_numbers = #tpu.dot_dimension_numbers<[1], [0], [0], [1], [0, 0, 1, 1], [], []>} : vector<2x128xf32>, vector<128x128xf32>, vector<2x128xf32> -> vector<2x128xf32>
    %71 = vector.extract_strided_slice %70 {offsets = [0, 0], sizes = [1, 128], strides = [1, 1]} : vector<2x128xf32> to vector<1x128xf32>
    %72 = vector.extract_strided_slice %70 {offsets = [1, 0], sizes = [1, 128], strides = [1, 1]} : vector<2x128xf32> to vector<1x128xf32>
    %73 = arith.mulf %71, %71 : vector<1x128xf32>
    %74 = arith.subf %72, %73 : vector<1x128xf32>
    %cst_36 = arith.constant 9.99999974E-6 : f32
    %75 = vector.broadcast %cst_36 : f32 to vector<1x128xf32>
    %76 = arith.addf %74, %75 : vector<1x128xf32>
    %77 = math.rsqrt %76 : vector<1x128xf32>
    %78 = vector.broadcast %71 : vector<1x128xf32> to vector<8x128xf32>
    %79 = arith.subf %62, %78 : vector<8x128xf32>
    %80 = vector.broadcast %77 : vector<1x128xf32> to vector<8x128xf32>
    %81 = arith.mulf %79, %80 : vector<8x128xf32>
    %c0_37 = arith.constant 0 : index
    %c0_38 = arith.constant 0 : index
    %82 = vector.load %arg11[%c0_37, %c0_38] : memref<1x128xf32, #tpu.memory_space<vmem>>, vector<1x128xf32>
    %83 = vector.broadcast %82 : vector<1x128xf32> to vector<8x128xf32>
    %84 = arith.mulf %81, %83 : vector<8x128xf32>
    %c0_39 = arith.constant 0 : index
    %c0_40 = arith.constant 0 : index
    %85 = vector.load %arg12[%c0_39, %c0_40] : memref<1x128xf32, #tpu.memory_space<vmem>>, vector<1x128xf32>
    %86 = vector.broadcast %85 : vector<1x128xf32> to vector<8x128xf32>
    %87 = arith.addf %84, %86 : vector<8x128xf32>
    %cst_41 = arith.constant 2.000000e-01 : f32
    %88 = vector.broadcast %cst_41 : f32 to vector<8x128xf32>
    %89 = arith.mulf %88, %87 : vector<8x128xf32>
    %90 = arith.maximumf %87, %89 : vector<8x128xf32>
    %c0_42 = arith.constant 0 : index
    %c0_43 = arith.constant 0 : index
    %91 = vector.load %arg13[%c0_42, %c0_43] : memref<128x128xf32, #tpu.memory_space<vmem>>, vector<128x128xf32>
    %cst_44 = arith.constant dense<0.000000e+00> : vector<8x128xf32>
    %92 = tpu.matmul %90, %91, %cst_44 {dimension_numbers = #tpu.dot_dimension_numbers<[1], [0], [0], [1], [0, 0, 1, 1], [], []>} : vector<8x128xf32>, vector<128x128xf32>, vector<8x128xf32> -> vector<8x128xf32>
    %cst_45 = arith.constant dense<0.000000e+00> : vector<128xf32>
    %93 = vector.multi_reduction <add>, %92, %cst_45 [0] : vector<8x128xf32> to vector<128xf32>
    %94 = vector.shape_cast %93 : vector<128xf32> to vector<1x128xf32>
    %95 = arith.mulf %92, %92 : vector<8x128xf32>
    %cst_46 = arith.constant dense<0.000000e+00> : vector<128xf32>
    %96 = vector.multi_reduction <add>, %95, %cst_46 [0] : vector<8x128xf32> to vector<128xf32>
    %97 = vector.shape_cast %96 : vector<128xf32> to vector<1x128xf32>
    %98 = tpu.concatenate %94, %97 in 0 : vector<1x128xf32>, vector<1x128xf32> -> vector<2x128xf32>
    %c0_47 = arith.constant 0 : index
    %c0_48 = arith.constant 0 : index
    %99 = vector.load %arg14[%c0_47, %c0_48] : memref<128x128xf32, #tpu.memory_space<vmem>>, vector<128x128xf32>
    %cst_49 = arith.constant dense<0.000000e+00> : vector<2x128xf32>
    %100 = tpu.matmul %98, %99, %cst_49 {dimension_numbers = #tpu.dot_dimension_numbers<[1], [0], [0], [1], [0, 0, 1, 1], [], []>} : vector<2x128xf32>, vector<128x128xf32>, vector<2x128xf32> -> vector<2x128xf32>
    %101 = vector.extract_strided_slice %100 {offsets = [0, 0], sizes = [1, 128], strides = [1, 1]} : vector<2x128xf32> to vector<1x128xf32>
    %102 = vector.extract_strided_slice %100 {offsets = [1, 0], sizes = [1, 128], strides = [1, 1]} : vector<2x128xf32> to vector<1x128xf32>
    %103 = arith.mulf %101, %101 : vector<1x128xf32>
    %104 = arith.subf %102, %103 : vector<1x128xf32>
    %cst_50 = arith.constant 9.99999974E-6 : f32
    %105 = vector.broadcast %cst_50 : f32 to vector<1x128xf32>
    %106 = arith.addf %104, %105 : vector<1x128xf32>
    %107 = math.rsqrt %106 : vector<1x128xf32>
    %108 = vector.broadcast %101 : vector<1x128xf32> to vector<8x128xf32>
    %109 = arith.subf %92, %108 : vector<8x128xf32>
    %110 = vector.broadcast %107 : vector<1x128xf32> to vector<8x128xf32>
    %111 = arith.mulf %109, %110 : vector<8x128xf32>
    %c0_51 = arith.constant 0 : index
    %c0_52 = arith.constant 0 : index
    %112 = vector.load %arg15[%c0_51, %c0_52] : memref<1x128xf32, #tpu.memory_space<vmem>>, vector<1x128xf32>
    %113 = vector.broadcast %112 : vector<1x128xf32> to vector<8x128xf32>
    %114 = arith.mulf %111, %113 : vector<8x128xf32>
    %c0_53 = arith.constant 0 : index
    %c0_54 = arith.constant 0 : index
    %115 = vector.load %arg16[%c0_53, %c0_54] : memref<1x128xf32, #tpu.memory_space<vmem>>, vector<1x128xf32>
    %116 = vector.broadcast %115 : vector<1x128xf32> to vector<8x128xf32>
    %117 = arith.addf %114, %116 : vector<8x128xf32>
    %118 = math.tanh %117 : vector<8x128xf32>
    %cst_55 = arith.constant 5.000000e-01 : f32
    %119 = vector.broadcast %cst_55 : f32 to vector<8x128xf32>
    %120 = arith.mulf %119, %118 : vector<8x128xf32>
    %c0_56 = arith.constant 0 : index
    %c0_57 = arith.constant 0 : index
    %121 = vector.load %arg17[%c0_56, %c0_57] : memref<8x128xf32, #tpu.memory_space<vmem>>, vector<8x128xf32>
    tpu.vector_store %arg17[%c0_56, %c0_57], %120 {strides = array<i32>} : memref<8x128xf32, #tpu.memory_space<vmem>>, vector<8x128xf32>,
    return
  }
}

</mosaic_0001>

<llo_original>
// kernel: tpu_custom_call.1
$region0: #{tpu_custom_call.1}
  #allocation0 [shape = 'u32[]', space=smem, size = 0x4, offset = 0x4, fixed_abs, tag = 'smem constant byte address 0x4 - core index']
  #allocation1 [shape = 'u32[144,128]{1,0:T(1,128)}', space=vmem, size = 0x12000, scoped, tag = 'internal scratch']
  %s0 = inlined_call_operand.hbm [shape: f32[8,128], index: 0, kind: input, shape index: {}]
  %s1 = inlined_call_operand.hbm [shape: f32[128,128], index: 1, kind: input, shape index: {}]
  %s2 = inlined_call_operand.hbm [shape: f32[128,128], index: 2, kind: input, shape index: {}]
  %s3 = inlined_call_operand.vmem [shape: f32[1,128], index: 3, kind: input, shape index: {}]
  %s4 = inlined_call_operand.vmem [shape: f32[1,128], index: 4, kind: input, shape index: {}]
  %s5 = inlined_call_operand.hbm [shape: f32[128,128], index: 5, kind: input, shape index: {}]
  %s6 = inlined_call_operand.hbm [shape: f32[128,128], index: 6, kind: input, shape index: {}]
  %s7 = inlined_call_operand.vmem [shape: f32[1,128], index: 7, kind: input, shape index: {}]
  %s8 = inlined_call_operand.vmem [shape: f32[1,128], index: 8, kind: input, shape index: {}]
  %s9 = inlined_call_operand.hbm [shape: f32[128,128], index: 9, kind: input, shape index: {}]
  %s10 = inlined_call_operand.hbm [shape: f32[128,128], index: 10, kind: input, shape index: {}]
  %s11 = inlined_call_operand.vmem [shape: f32[1,128], index: 11, kind: input, shape index: {}]
  %s12 = inlined_call_operand.vmem [shape: f32[1,128], index: 12, kind: input, shape index: {}]
  %s13 = inlined_call_operand.hbm [shape: f32[128,128], index: 13, kind: input, shape index: {}]
  %s14 = inlined_call_operand.hbm [shape: f32[128,128], index: 14, kind: input, shape index: {}]
  %s15 = inlined_call_operand.vmem [shape: f32[1,128], index: 15, kind: input, shape index: {}]
  %s16 = inlined_call_operand.vmem [shape: f32[1,128], index: 16, kind: input, shape index: {}]
  %s17 = inlined_call_operand.hbm [shape: f32[8,128], index: 17, kind: output, shape index: {}]
  %s18 = sld [smem:[#allocation0]]
  $region114: #{tpu_custom_call.1} parent=0
    _
  %s20 = ssub.s32 1, %s18
  %s21 = scalar_select 0, %s20, %s18
  $region1: #{tpu_custom_call.1} parent=0
    #allocation2 [shape = 'u8[4096]{0}', space=vmem, size = 0x1000, scoped, tag = 'input window, operand 0, single buffered']
    #allocation3 [shape = 's32[1]{0}', space=sflag, size = 0x4, scoped, tag = 'scoped memory for tpu_custom_call.1']
    #allocation4 [shape = 's32[1]{0}', space=sflag, size = 0x4, scoped, tag = 'scoped memory for tpu_custom_call.1']
    #allocation5 [shape = 'u8[65536]{0}', space=vmem, size = 0x10000, scoped, tag = 'input window, operand 1, single buffered']
    #allocation6 [shape = 's32[1]{0}', space=sflag, size = 0x4, scoped, tag = 'scoped memory for tpu_custom_call.1']
    #allocation7 [shape = 'u8[65536]{0}', space=vmem, size = 0x10000, scoped, tag = 'input window, operand 2, single buffered']
    #allocation8 [shape = 'u8[65536]{0}', space=vmem, size = 0x10000, scoped, tag = 'input window, operand 5, single buffered']
    #allocation9 [shape = 's32[1]{0}', space=sflag, size = 0x4, scoped, tag = 'scoped memory for tpu_custom_call.1']
    #allocation10 [shape = 'u8[65536]{0}', space=vmem, size = 0x10000, scoped, tag = 'input window, operand 6, single buffered']
    #allocation11 [shape = 'u8[65536]{0}', space=vmem, size = 0x10000, scoped, tag = 'input window, operand 9, single buffered']
    #allocation12 [shape = 's32[1]{0}', space=sflag, size = 0x4, scoped, tag = 'scoped memory for tpu_custom_call.1']
    #allocation13 [shape = 'u8[65536]{0}', space=vmem, size = 0x10000, scoped, tag = 'input window, operand 10, single buffered']
    #allocation14 [shape = 'u8[65536]{0}', space=vmem, size = 0x10000, scoped, tag = 'input window, operand 13, single buffered']
    #allocation15 [shape = 's32[1]{0}', space=sflag, size = 0x4, scoped, tag = 'scoped memory for tpu_custom_call.1']
    #allocation16 [shape = 'u8[65536]{0}', space=vmem, size = 0x10000, scoped, tag = 'input window, operand 14, single buffered']
    #allocation17 [shape = 'u8[4096]{0}', space=vmem, size = 0x1000, scoped, tag = 'output window, operand 0, single buffered']
    %22 = vsyncpa [#allocation3], 0
    %23 = vsyncpa [#allocation6], 0
    %24 = vsyncpa [#allocation9], 0
    %25 = vsyncpa [#allocation12], 0
    %26 = vsyncpa [#allocation15], 0
    %27 = vsyncpa [#allocation4], 0
    // Predicated region
    $region2: #{tpu_custom_call.1} parent=1 // pred_check
      _
    $region3: #{tpu_custom_call.1} parent=1 // pred_check_branch
      %29 = sbr.rel (0) target = $region5
    $region4: #{tpu_custom_call.1} parent=1 // pred_region
      %s31 = ssub.s32 128, 128
      %32 = vsyncadd [#allocation3], %s31
      %s34 = sshll.u32 [#allocation2], 4
      %s35 = int_to_ptr.vmem [resolvable:$true] %s34
      %37 = dma.hbm_to_vmem [thread:$0]  %s0, 128, %s35, [#allocation3]
    $region5: #{tpu_custom_call.1} parent=1 // pred_fallthru
      _
    // Predicated region
    $region6: #{tpu_custom_call.1} parent=1 // pred_check
      _
    $region7: #{tpu_custom_call.1} parent=1 // pred_check_branch
      %39 = sbr.rel (0) target = $region9
    $region8: #{tpu_custom_call.1} parent=1 // pred_region
      %s41 = ssub.s32 2048, 2048
      %42 = vsyncadd [#allocation6], %s41
      %s43 = sshll.u32 [#allocation5], 4
      %s44 = int_to_ptr.vmem [resolvable:$true] %s43
      %49 = dma.hbm_to_vmem [thread:$0]  %s1, 2048, %s44, [#allocation6], 128, 128, 8
    $region9: #{tpu_custom_call.1} parent=1 // pred_fallthru
      _
    // Predicated region
    $region10: #{tpu_custom_call.1} parent=1 // pred_check
      _
    $region11: #{tpu_custom_call.1} parent=1 // pred_check_branch
      %51 = sbr.rel (0) target = $region13
    $region12: #{tpu_custom_call.1} parent=1 // pred_region
      %s53 = ssub.s32 2048, 2048
      %54 = vsyncadd [#allocation6], %s53
      %s55 = sshll.u32 [#allocation7], 4
      %s56 = int_to_ptr.vmem [resolvable:$true] %s55
      %61 = dma.hbm_to_vmem [thread:$0]  %s2, 2048, %s56, [#allocation6], 128, 128, 8
    $region13: #{tpu_custom_call.1} parent=1 // pred_fallthru
      _
    // Predicated region
    $region14: #{tpu_custom_call.1} parent=1 // pred_check
      _
    $region15: #{tpu_custom_call.1} parent=1 // pred_check_branch
      %63 = sbr.rel (0) target = $region17
    $region16: #{tpu_custom_call.1} parent=1 // pred_region
      _
    $region17: #{tpu_custom_call.1} parent=1 // pred_fallthru
      _
    // Predicated region
    $region18: #{tpu_custom_call.1} parent=1 // pred_check
      _
    $region19: #{tpu_custom_call.1} parent=1 // pred_check_branch
      %65 = sbr.rel (0) target = $region21
    $region20: #{tpu_custom_call.1} parent=1 // pred_region
      _
    $region21: #{tpu_custom_call.1} parent=1 // pred_fallthru
      _
    // Predicated region
    $region22: #{tpu_custom_call.1} parent=1 // pred_check
      _
    $region23: #{tpu_custom_call.1} parent=1 // pred_check_branch
      %67 = sbr.rel (0) target = $region25
    $region24: #{tpu_custom_call.1} parent=1 // pred_region
      %s69 = ssub.s32 2048, 2048
      %70 = vsyncadd [#allocation9], %s69
      %s71 = sshll.u32 [#allocation8], 4
      %s72 = int_to_ptr.vmem [resolvable:$true] %s71
      %77 = dma.hbm_to_vmem [thread:$0]  %s5, 2048, %s72, [#allocation9], 128, 128, 8
    $region25: #{tpu_custom_call.1} parent=1 // pred_fallthru
      _
    // Predicated region
    $region26: #{tpu_custom_call.1} parent=1 // pred_check
      _
    $region27: #{tpu_custom_call.1} parent=1 // pred_check_branch
      %79 = sbr.rel (0) target = $region29
    $region28: #{tpu_custom_call.1} parent=1 // pred_region
      %s81 = ssub.s32 2048, 2048
      %82 = vsyncadd [#allocation9], %s81
      %s83 = sshll.u32 [#allocation10], 4
      %s84 = int_to_ptr.vmem [resolvable:$true] %s83
      %89 = dma.hbm_to_vmem [thread:$0]  %s6, 2048, %s84, [#allocation9], 128, 128, 8
    $region29: #{tpu_custom_call.1} parent=1 // pred_fallthru
      _
    // Predicated region
    $region30: #{tpu_custom_call.1} parent=1 // pred_check
      _
    $region31: #{tpu_custom_call.1} parent=1 // pred_check_branch
      %91 = sbr.rel (0) target = $region33
    $region32: #{tpu_custom_call.1} parent=1 // pred_region
      _
    $region33: #{tpu_custom_call.1} parent=1 // pred_fallthru
      _
    // Predicated region
    $region34: #{tpu_custom_call.1} parent=1 // pred_check
      _
    $region35: #{tpu_custom_call.1} parent=1 // pred_check_branch
      %93 = sbr.rel (0) target = $region37
    $region36: #{tpu_custom_call.1} parent=1 // pred_region
      _
    $region37: #{tpu_custom_call.1} parent=1 // pred_fallthru
      _
    // Predicated region
    $region38: #{tpu_custom_call.1} parent=1 // pred_check
      _
    $region39: #{tpu_custom_call.1} parent=1 // pred_check_branch
      %95 = sbr.rel (0) target = $region41
    $region40: #{tpu_custom_call.1} parent=1 // pred_region
      %s97 = ssub.s32 2048, 2048
      %98 = vsyncadd [#allocation12], %s97
      %s99 = sshll.u32 [#allocation11], 4
      %s100 = int_to_ptr.vmem [resolvable:$true] %s99
      %105 = dma.hbm_to_vmem [thread:$0]  %s9, 2048, %s100, [#allocation12], 128, 128, 8
    $region41: #{tpu_custom_call.1} parent=1 // pred_fallthru
      _
    // Predicated region
    $region42: #{tpu_custom_call.1} parent=1 // pred_check
      _
    $region43: #{tpu_custom_call.1} parent=1 // pred_check_branch
      %107 = sbr.rel (0) target = $region45
    $region44: #{tpu_custom_call.1} parent=1 // pred_region
      %s109 = ssub.s32 2048, 2048
      %110 = vsyncadd [#allocation12], %s109
      %s111 = sshll.u32 [#allocation13], 4
      %s112 = int_to_ptr.vmem [resolvable:$true] %s111
      %117 = dma.hbm_to_vmem [thread:$0]  %s10, 2048, %s112, [#allocation12], 128, 128, 8
    $region45: #{tpu_custom_call.1} parent=1 // pred_fallthru
      _
    // Predicated region
    $region46: #{tpu_custom_call.1} parent=1 // pred_check
      _
    $region47: #{tpu_custom_call.1} parent=1 // pred_check_branch
      %119 = sbr.rel (0) target = $region49
    $region48: #{tpu_custom_call.1} parent=1 // pred_region
      _
    $region49: #{tpu_custom_call.1} parent=1 // pred_fallthru
      _
    // Predicated region
    $region50: #{tpu_custom_call.1} parent=1 // pred_check
      _
    $region51: #{tpu_custom_call.1} parent=1 // pred_check_branch
      %121 = sbr.rel (0) target = $region53
    $region52: #{tpu_custom_call.1} parent=1 // pred_region
      _
    $region53: #{tpu_custom_call.1} parent=1 // pred_fallthru
      _
    // Predicated region
    $region54: #{tpu_custom_call.1} parent=1 // pred_check
      _
    $region55: #{tpu_custom_call.1} parent=1 // pred_check_branch
      %123 = sbr.rel (0) target = $region57
    $region56: #{tpu_custom_call.1} parent=1 // pred_region
      %s125 = ssub.s32 2048, 2048
      %126 = vsyncadd [#allocation15], %s125
      %s127 = sshll.u32 [#allocation14], 4
      %s128 = int_to_ptr.vmem [resolvable:$true] %s127
      %133 = dma.hbm_to_vmem [thread:$0]  %s13, 2048, %s128, [#allocation15], 128, 128, 8
    $region57: #{tpu_custom_call.1} parent=1 // pred_fallthru
      _
    // Predicated region
    $region58: #{tpu_custom_call.1} parent=1 // pred_check
      _
    $region59: #{tpu_custom_call.1} parent=1 // pred_check_branch
      %135 = sbr.rel (0) target = $region61
    $region60: #{tpu_custom_call.1} parent=1 // pred_region
      %s137 = ssub.s32 2048, 2048
      %138 = vsyncadd [#allocation15], %s137
      %s139 = sshll.u32 [#allocation16], 4
      %s140 = int_to_ptr.vmem [resolvable:$true] %s139
      %145 = dma.hbm_to_vmem [thread:$0]  %s14, 2048, %s140, [#allocation15], 128, 128, 8
    $region61: #{tpu_custom_call.1} parent=1 // pred_fallthru
      _
    // Predicated region
    $region62: #{tpu_custom_call.1} parent=1 // pred_check
      _
    $region63: #{tpu_custom_call.1} parent=1 // pred_check_branch
      %147 = sbr.rel (0) target = $region65
    $region64: #{tpu_custom_call.1} parent=1 // pred_region
      _
    $region65: #{tpu_custom_call.1} parent=1 // pred_fallthru
      _
    // Predicated region
    $region66: #{tpu_custom_call.1} parent=1 // pred_check
      _
    $region67: #{tpu_custom_call.1} parent=1 // pred_check_branch
      %149 = sbr.rel (0) target = $region69
    $region68: #{tpu_custom_call.1} parent=1 // pred_region
      _
    $region69: #{tpu_custom_call.1} parent=1 // pred_fallthru
      _
    // Predicated region
    $region70: #{tpu_custom_call.1} parent=1 // pred_check
      _
    $region71: #{tpu_custom_call.1} parent=1 // pred_check_branch
      %151 = sbr.rel (0) target = $region73
    $region72: #{tpu_custom_call.1} parent=1 // pred_region
      %152 = dma.done [#allocation3], 128
    $region73: #{tpu_custom_call.1} parent=1 // pred_fallthru
      _
    // Predicated region
    $region74: #{tpu_custom_call.1} parent=1 // pred_check
      _
    $region75: #{tpu_custom_call.1} parent=1 // pred_check_branch
      %154 = sbr.rel (0) target = $region77
    $region76: #{tpu_custom_call.1} parent=1 // pred_region
      %155 = dma.done [#allocation6], 2048
    $region77: #{tpu_custom_call.1} parent=1 // pred_fallthru
      _
    // Predicated region
    $region78: #{tpu_custom_call.1} parent=1 // pred_check
      _
    $region79: #{tpu_custom_call.1} parent=1 // pred_check_branch
      %157 = sbr.rel (0) target = $region81
    $region80: #{tpu_custom_call.1} parent=1 // pred_region
      %158 = dma.done [#allocation6], 2048
    $region81: #{tpu_custom_call.1} parent=1 // pred_fallthru
      _
    // Predicated region
    $region82: #{tpu_custom_call.1} parent=1 // pred_check
      _
    $region83: #{tpu_custom_call.1} parent=1 // pred_check_branch
      %160 = sbr.rel (0) target = $region85
    $region84: #{tpu_custom_call.1} parent=1 // pred_region
      %161 = dma.done [#allocation9], 2048
    $region85: #{tpu_custom_call.1} parent=1 // pred_fallthru
      _
    // Predicated region
    $region86: #{tpu_custom_call.1} parent=1 // pred_check
      _
    $region87: #{tpu_custom_call.1} parent=1 // pred_check_branch
      %163 = sbr.rel (0) target = $region89
    $region88: #{tpu_custom_call.1} parent=1 // pred_region
      %164 = dma.done [#allocation9], 2048
    $region89: #{tpu_custom_call.1} parent=1 // pred_fallthru
      _
    // Predicated region
    $region90: #{tpu_custom_call.1} parent=1 // pred_check
      _
    $region91: #{tpu_custom_call.1} parent=1 // pred_check_branch
      %166 = sbr.rel (0) target = $region93
    $region92: #{tpu_custom_call.1} parent=1 // pred_region
      %167 = dma.done [#allocation12], 2048
    $region93: #{tpu_custom_call.1} parent=1 // pred_fallthru
      _
    // Predicated region
    $region94: #{tpu_custom_call.1} parent=1 // pred_check
      _
    $region95: #{tpu_custom_call.1} parent=1 // pred_check_branch
      %169 = sbr.rel (0) target = $region97
    $region96: #{tpu_custom_call.1} parent=1 // pred_region
      %170 = dma.done [#allocation12], 2048
    $region97: #{tpu_custom_call.1} parent=1 // pred_fallthru
      _
    // Predicated region
    $region98: #{tpu_custom_call.1} parent=1 // pred_check
      _
    $region99: #{tpu_custom_call.1} parent=1 // pred_check_branch
      %172 = sbr.rel (0) target = $region101
    $region100: #{tpu_custom_call.1} parent=1 // pred_region
      %173 = dma.done [#allocation15], 2048
    $region101: #{tpu_custom_call.1} parent=1 // pred_fallthru
      _
    // Predicated region
    $region102: #{tpu_custom_call.1} parent=1 // pred_check
      _
    $region103: #{tpu_custom_call.1} parent=1 // pred_check_branch
      %175 = sbr.rel (0) target = $region105
    $region104: #{tpu_custom_call.1} parent=1 // pred_region
      %176 = dma.done [#allocation15], 2048
    $region105: #{tpu_custom_call.1} parent=1 // pred_fallthru
      _
    %v177 = vld [vmem:[#allocation2] sm:$0xff]
    %v178 = vld [vmem:[#allocation5] sm:$0xff]
    %v179 = vld [vmem:[#allocation5 + $0x8] sm:$0xff]
    %v180 = vld [vmem:[#allocation5 + $0x10] sm:$0xff]
    %v181 = vld [vmem:[#allocation5 + $0x18] sm:$0xff]
    %v182 = vld [vmem:[#allocation5 + $0x20] sm:$0xff]
    %v183 = vld [vmem:[#allocation5 + $0x28] sm:$0xff]
    %v184 = vld [vmem:[#allocation5 + $0x30] sm:$0xff]
    %v185 = vld [vmem:[#allocation5 + $0x38] sm:$0xff]
    %v186 = vld [vmem:[#allocation5 + $0x40] sm:$0xff]
    %v187 = vld [vmem:[#allocation5 + $0x48] sm:$0xff]
    %v188 = vld [vmem:[#allocation5 + $0x50] sm:$0xff]
    %v189 = vld [vmem:[#allocation5 + $0x58] sm:$0xff]
    %v190 = vld [vmem:[#allocation5 + $0x60] sm:$0xff]
    %v191 = vld [vmem:[#allocation5 + $0x68] sm:$0xff]
    %v192 = vld [vmem:[#allocation5 + $0x70] sm:$0xff]
    %v193 = vld [vmem:[#allocation5 + $0x78] sm:$0xff]
    %194 = vmatprep.subr.mxu0 0.0
    %195 = vmatpush1.msra.mxu0 %v178
    %196 = vmatprep.subr.mxu0 0.0
    %197 = vmatpush1.msra.mxu0 %v179
    %198 = vmatprep.subr.mxu0 0.0
    %199 = vmatpush1.msra.mxu0 %v180
    %200 = vmatprep.subr.mxu0 0.0
    %201 = vmatpush1.msra.mxu0 %v181
    %202 = vmatprep.subr.mxu0 0.0
    %203 = vmatpush1.msra.mxu0 %v182
    %204 = vmatprep.subr.mxu0 0.0
    %205 = vmatpush1.msra.mxu0 %v183
    %206 = vmatprep.subr.mxu0 0.0
    %207 = vmatpush1.msra.mxu0 %v184
    %208 = vmatprep.subr.mxu0 0.0
    %209 = vmatpush1.msra.mxu0 %v185
    %210 = vmatprep.subr.mxu0 0.0
    %211 = vmatpush1.msra.mxu0 %v186
    %212 = vmatprep.subr.mxu0 0.0
    %213 = vmatpush1.msra.mxu0 %v187
    %214 = vmatprep.subr.mxu0 0.0
    %215 = vmatpush1.msra.mxu0 %v188
    %216 = vmatprep.subr.mxu0 0.0
    %217 = vmatpush1.msra.mxu0 %v189
    %218 = vmatprep.subr.mxu0 0.0
    %219 = vmatpush1.msra.mxu0 %v190
    %220 = vmatprep.subr.mxu0 0.0
    %221 = vmatpush1.msra.mxu0 %v191
    %222 = vmatprep.subr.mxu0 0.0
    %223 = vmatpush1.msra.mxu0 %v192
    %224 = vmatprep.subr.mxu0 0.0
    %225 = vmatpush1.msra.mxu0 %v193
    %226 = vmatprep.subr.mxu0 0.0
    %227 = vmatpush1.msra.mxu0 0.0
    %228 = vmatprep.subr.mxu0 0.0
    %229 = vmatpush1.msra.mxu0 0.0
    %230 = vmatprep.subr.mxu0 0.0
    %231 = vmatpush1.msra.mxu0 0.0
    %232 = vmatprep.subr.mxu0 0.0
    %233 = vmatpush1.msra.mxu0 0.0
    %234 = vmatprep.subr.mxu0 0.0
    %235 = vmatpush1.msra.mxu0 0.0
    %236 = vmatprep.subr.mxu0 0.0
    %237 = vmatpush1.msra.mxu0 0.0
    %238 = vmatprep.subr.mxu0 0.0
    %239 = vmatpush1.msra.mxu0 0.0
    %240 = vmatprep.subr.mxu0 0.0
    %241 = vmatpush1.msra.mxu0 0.0
    %242 = vmatprep.subr.mxu0 0.0
    %243 = vmatpush1.msra.mxu0 0.0
    %244 = vmatprep.subr.mxu0 0.0
    %245 = vmatpush1.msra.mxu0 0.0
    %246 = vmatprep.subr.mxu0 0.0
    %247 = vmatpush1.msra.mxu0 0.0
    %248 = vmatprep.subr.mxu0 0.0
    %249 = vmatpush1.msra.mxu0 0.0
    %250 = vmatprep.subr.mxu0 0.0
    %251 = vmatpush1.msra.mxu0 0.0
    %252 = vmatprep.subr.mxu0 0.0
    %253 = vmatpush1.msra.mxu0 0.0
    %254 = vmatprep.subr.mxu0 0.0
    %255 = vmatpush1.msra.mxu0 0.0
    %256 = vmatprep.subr.mxu0 0.0
    %257 = vmatpush1.msra.mxu0 0.0
    %258 = vmatprep.mubr.f32.mxu0 0.0
    %259 = vmatmul.mubr.f32.gmra.mrb[0].mxu0 %v177
    %v260 = vpop.f32.mrb[0].mxu0
    %v261 = vadd.f32 0.0, %v260
    %v262 = vpop.f32.mrb[0].mxu0
    %263 = vdwg.mxu0
    %v264 = vrot.slane %v261, 4
    %v265 = vadd.f32 %v261, %v264
    %v266 = vrot.slane %v265, 2
    %v267 = vadd.f32 %v265, %v266
    %v268 = vrot.slane %v267, 1
    %v269 = vadd.f32 %v267, %v268
    %v270 = vmul.f32 %v261, %v261
    %v271 = vrot.slane %v270, 4
    %v272 = vadd.f32 %v270, %v271
    %v273 = vrot.slane %v272, 2
    %v274 = vadd.f32 %v272, %v273
    %v275 = vrot.slane %v274, 1
    %v276 = vadd.f32 %v274, %v275
    %vm277 = vcmask 1040384
    %v278 = vsel %vm277, %v269, %v276
    %v279 = vld [vmem:[#allocation7] sm:$0xff]
    %v280 = vld [vmem:[#allocation7 + $0x8] sm:$0xff]
    %v281 = vld [vmem:[#allocation7 + $0x10] sm:$0xff]
    %v282 = vld [vmem:[#allocation7 + $0x18] sm:$0xff]
    %v283 = vld [vmem:[#allocation7 + $0x20] sm:$0xff]
    %v284 = vld [vmem:[#allocation7 + $0x28] sm:$0xff]
    %v285 = vld [vmem:[#allocation7 + $0x30] sm:$0xff]
    %v286 = vld [vmem:[#allocation7 + $0x38] sm:$0xff]
    %v287 = vld [vmem:[#allocation7 + $0x40] sm:$0xff]
    %v288 = vld [vmem:[#allocation7 + $0x48] sm:$0xff]
    %v289 = vld [vmem:[#allocation7 + $0x50] sm:$0xff]
    %v290 = vld [vmem:[#allocation7 + $0x58] sm:$0xff]
    %v291 = vld [vmem:[#allocation7 + $0x60] sm:$0xff]
    %v292 = vld [vmem:[#allocation7 + $0x68] sm:$0xff]
    %v293 = vld [vmem:[#allocation7 + $0x70] sm:$0xff]
    %v294 = vld [vmem:[#allocation7 + $0x78] sm:$0xff]
    %295 = vmatprep.subr.mxu0 0.0
    %296 = vmatpush1.msra.mxu0 %v279
    %297 = vmatprep.subr.mxu0 0.0
    %298 = vmatpush1.msra.mxu0 %v280
    %299 = vmatprep.subr.mxu0 0.0
    %300 = vmatpush1.msra.mxu0 %v281
    %301 = vmatprep.subr.mxu0 0.0
    %302 = vmatpush1.msra.mxu0 %v282
    %303 = vmatprep.subr.mxu0 0.0
    %304 = vmatpush1.msra.mxu0 %v283
    %305 = vmatprep.subr.mxu0 0.0
    %306 = vmatpush1.msra.mxu0 %v284
    %307 = vmatprep.subr.mxu0 0.0
    %308 = vmatpush1.msra.mxu0 %v285
    %309 = vmatprep.subr.mxu0 0.0
    %310 = vmatpush1.msra.mxu0 %v286
    %311 = vmatprep.subr.mxu0 0.0
    %312 = vmatpush1.msra.mxu0 %v287
    %313 = vmatprep.subr.mxu0 0.0
    %314 = vmatpush1.msra.mxu0 %v288
    %315 = vmatprep.subr.mxu0 0.0
    %316 = vmatpush1.msra.mxu0 %v289
    %317 = vmatprep.subr.mxu0 0.0
    %318 = vmatpush1.msra.mxu0 %v290
    %319 = vmatprep.subr.mxu0 0.0
    %320 = vmatpush1.msra.mxu0 %v291
    %321 = vmatprep.subr.mxu0 0.0
    %322 = vmatpush1.msra.mxu0 %v292
    %323 = vmatprep.subr.mxu0 0.0
    %324 = vmatpush1.msra.mxu0 %v293
    %325 = vmatprep.subr.mxu0 0.0
    %326 = vmatpush1.msra.mxu0 %v294
    %327 = vmatprep.subr.mxu0 0.0
    %328 = vmatpush1.msra.mxu0 0.0
    %329 = vmatprep.subr.mxu0 0.0
    %330 = vmatpush1.msra.mxu0 0.0
    %331 = vmatprep.subr.mxu0 0.0
    %332 = vmatpush1.msra.mxu0 0.0
    %333 = vmatprep.subr.mxu0 0.0
    %334 = vmatpush1.msra.mxu0 0.0
    %335 = vmatprep.subr.mxu0 0.0
    %336 = vmatpush1.msra.mxu0 0.0
    %337 = vmatprep.subr.mxu0 0.0
    %338 = vmatpush1.msra.mxu0 0.0
    %339 = vmatprep.subr.mxu0 0.0
    %340 = vmatpush1.msra.mxu0 0.0
    %341 = vmatprep.subr.mxu0 0.0
    %342 = vmatpush1.msra.mxu0 0.0
    %343 = vmatprep.subr.mxu0 0.0
    %344 = vmatpush1.msra.mxu0 0.0
    %345 = vmatprep.subr.mxu0 0.0
    %346 = vmatpush1.msra.mxu0 0.0
    %347 = vmatprep.subr.mxu0 0.0
    %348 = vmatpush1.msra.mxu0 0.0
    %349 = vmatprep.subr.mxu0 0.0
    %350 = vmatpush1.msra.mxu0 0.0
    %351 = vmatprep.subr.mxu0 0.0
    %352 = vmatpush1.msra.mxu0 0.0
    %353 = vmatprep.subr.mxu0 0.0
    %354 = vmatpush1.msra.mxu0 0.0
    %355 = vmatprep.subr.mxu0 0.0
    %356 = vmatpush1.msra.mxu0 0.0
    %357 = vmatprep.subr.mxu0 0.0
    %358 = vmatpush1.msra.mxu0 0.0
    %359 = vmatprep.mubr.f32.mxu0 0.0
    %360 = vmatmul.mubr.f32.gmra.mrb[0].mxu0 %v278
    %v361 = vpop.f32.mrb[0].mxu0
    %v362 = vadd.f32 0.0, %v361
    %v363 = vpop.f32.mrb[0].mxu0
    %364 = vdwg.mxu0
    %v365 = vmul.f32 %v362, %v362
    %v367 = vrot.slane %v365, 7
    %v369 = vsub.f32 %v362, %v367
    %v370 = vadd.f32 %v369, 1e-05
    %v371 = vrsqrt.pop %v370
    %v372 = vlaneseq
    %v373 = vshrl.u32 %v372, 7
    %v374 = vsub.s32 0, %v373
    %v375 = vrot.slane %v362, %v374
    %v376 = vsub.f32 %v261, %v375
    %v377 = vlaneseq
    %v378 = vshrl.u32 %v377, 7
    %v379 = vsub.s32 1, %v378
    %v380 = vrot.slane %v371, %v379
    %v381 = vmul.f32 %v376, %v380
    %v382 = vld [vmem:[%s3] sm:$0x1]
    %v384 = vlaneseq
    %v385 = vshrl.u32 %v384, 7
    %v386 = vsub.s32 0, %v385
    %v387 = vrot.slane %v382, %v386
    %v389 = vmul.f32 %v381, %v387
    %v390 = vld [vmem:[%s4] sm:$0x1]
    %v392 = vlaneseq
    %v393 = vshrl.u32 %v392, 7
    %v394 = vsub.s32 0, %v393
    %v395 = vrot.slane %v390, %v394
    %v397 = vadd.f32 %v389, %v395
    %v398 = vmul.f32 %v397, 0.2
    %v399 = vmax.f32 %v397, %v398
    %v400 = vld [vmem:[#allocation8] sm:$0xff]
    %v401 = vld [vmem:[#allocation8 + $0x8] sm:$0xff]
    %v402 = vld [vmem:[#allocation8 + $0x10] sm:$0xff]
    %v403 = vld [vmem:[#allocation8 + $0x18] sm:$0xff]
    %v404 = vld [vmem:[#allocation8 + $0x20] sm:$0xff]
    %v405 = vld [vmem:[#allocation8 + $0x28] sm:$0xff]
    %v406 = vld [vmem:[#allocation8 + $0x30] sm:$0xff]
    %v407 = vld [vmem:[#allocation8 + $0x38] sm:$0xff]
    %v408 = vld [vmem:[#allocation8 + $0x40] sm:$0xff]
    %v409 = vld [vmem:[#allocation8 + $0x48] sm:$0xff]
    %v410 = vld [vmem:[#allocation8 + $0x50] sm:$0xff]
    %v411 = vld [vmem:[#allocation8 + $0x58] sm:$0xff]
    %v412 = vld [vmem:[#allocation8 + $0x60] sm:$0xff]
    %v413 = vld [vmem:[#allocation8 + $0x68] sm:$0xff]
    %v414 = vld [vmem:[#allocation8 + $0x70] sm:$0xff]
    %v415 = vld [vmem:[#allocation8 + $0x78] sm:$0xff]
    %416 = vmatprep.subr.mxu0 0.0
    %417 = vmatpush1.msra.mxu0 %v400
    %418 = vmatprep.subr.mxu0 0.0
    %419 = vmatpush1.msra.mxu0 %v401
    %420 = vmatprep.subr.mxu0 0.0
    %421 = vmatpush1.msra.mxu0 %v402
    %422 = vmatprep.subr.mxu0 0.0
    %423 = vmatpush1.msra.mxu0 %v403
    %424 = vmatprep.subr.mxu0 0.0
    %425 = vmatpush1.msra.mxu0 %v404
    %426 = vmatprep.subr.mxu0 0.0
    %427 = vmatpush1.msra.mxu0 %v405
    %428 = vmatprep.subr.mxu0 0.0
    %429 = vmatpush1.msra.mxu0 %v406
    %430 = vmatprep.subr.mxu0 0.0
    %431 = vmatpush1.msra.mxu0 %v407
    %432 = vmatprep.subr.mxu0 0.0
    %433 = vmatpush1.msra.mxu0 %v408
    %434 = vmatprep.subr.mxu0 0.0
    %435 = vmatpush1.msra.mxu0 %v409
    %436 = vmatprep.subr.mxu0 0.0
    %437 = vmatpush1.msra.mxu0 %v410
    %438 = vmatprep.subr.mxu0 0.0
    %439 = vmatpush1.msra.mxu0 %v411
    %440 = vmatprep.subr.mxu0 0.0
    %441 = vmatpush1.msra.mxu0 %v412
    %442 = vmatprep.subr.mxu0 0.0
    %443 = vmatpush1.msra.mxu0 %v413
    %444 = vmatprep.subr.mxu0 0.0
    %445 = vmatpush1.msra.mxu0 %v414
    %446 = vmatprep.subr.mxu0 0.0
    %447 = vmatpush1.msra.mxu0 %v415
    %448 = vmatprep.subr.mxu0 0.0
    %449 = vmatpush1.msra.mxu0 0.0
    %450 = vmatprep.subr.mxu0 0.0
    %451 = vmatpush1.msra.mxu0 0.0
    %452 = vmatprep.subr.mxu0 0.0
    %453 = vmatpush1.msra.mxu0 0.0
    %454 = vmatprep.subr.mxu0 0.0
    %455 = vmatpush1.msra.mxu0 0.0
    %456 = vmatprep.subr.mxu0 0.0
    %457 = vmatpush1.msra.mxu0 0.0
    %458 = vmatprep.subr.mxu0 0.0
    %459 = vmatpush1.msra.mxu0 0.0
    %460 = vmatprep.subr.mxu0 0.0
    %461 = vmatpush1.msra.mxu0 0.0
    %462 = vmatprep.subr.mxu0 0.0
    %463 = vmatpush1.msra.mxu0 0.0
    %464 = vmatprep.subr.mxu0 0.0
    %465 = vmatpush1.msra.mxu0 0.0
    %466 = vmatprep.subr.mxu0 0.0
    %467 = vmatpush1.msra.mxu0 0.0
    %468 = vmatprep.subr.mxu0 0.0
    %469 = vmatpush1.msra.mxu0 0.0
    %470 = vmatprep.subr.mxu0 0.0
    %471 = vmatpush1.msra.mxu0 0.0
    %472 = vmatprep.subr.mxu0 0.0
    %473 = vmatpush1.msra.mxu0 0.0
    %474 = vmatprep.subr.mxu0 0.0
    %475 = vmatpush1.msra.mxu0 0.0
    %476 = vmatprep.subr.mxu0 0.0
    %477 = vmatpush1.msra.mxu0 0.0
    %478 = vmatprep.subr.mxu0 0.0
    %479 = vmatpush1.msra.mxu0 0.0
    %480 = vmatprep.mubr.f32.mxu0 0.0
    %481 = vmatmul.mubr.f32.gmra.mrb[0].mxu0 %v399
    %v482 = vpop.f32.mrb[0].mxu0
    %v483 = vadd.f32 0.0, %v482
    %v484 = vpop.f32.mrb[0].mxu0
    %485 = vdwg.mxu0
    %v486 = vrot.slane %v483, 4
    %v487 = vadd.f32 %v483, %v486
    %v488 = vrot.slane %v487, 2
    %v489 = vadd.f32 %v487, %v488
    %v490 = vrot.slane %v489, 1
    %v491 = vadd.f32 %v489, %v490
    %v492 = vmul.f32 %v483, %v483
    %v493 = vrot.slane %v492, 4
    %v494 = vadd.f32 %v492, %v493
    %v495 = vrot.slane %v494, 2
    %v496 = vadd.f32 %v494, %v495
    %v497 = vrot.slane %v496, 1
    %v498 = vadd.f32 %v496, %v497
    %v499 = vsel %vm277, %v491, %v498
    %v500 = vld [vmem:[#allocation10] sm:$0xff]
    %v501 = vld [vmem:[#allocation10 + $0x8] sm:$0xff]
    %v502 = vld [vmem:[#allocation10 + $0x10] sm:$0xff]
    %v503 = vld [vmem:[#allocation10 + $0x18] sm:$0xff]
    %v504 = vld [vmem:[#allocation10 + $0x20] sm:$0xff]
    %v505 = vld [vmem:[#allocation10 + $0x28] sm:$0xff]
    %v506 = vld [vmem:[#allocation10 + $0x30] sm:$0xff]
    %v507 = vld [vmem:[#allocation10 + $0x38] sm:$0xff]
    %v508 = vld [vmem:[#allocation10 + $0x40] sm:$0xff]
    %v509 = vld [vmem:[#allocation10 + $0x48] sm:$0xff]
    %v510 = vld [vmem:[#allocation10 + $0x50] sm:$0xff]
    %v511 = vld [vmem:[#allocation10 + $0x58] sm:$0xff]
    %v512 = vld [vmem:[#allocation10 + $0x60] sm:$0xff]
    %v513 = vld [vmem:[#allocation10 + $0x68] sm:$0xff]
    %v514 = vld [vmem:[#allocation10 + $0x70] sm:$0xff]
    %v515 = vld [vmem:[#allocation10 + $0x78] sm:$0xff]
    %516 = vmatprep.subr.mxu0 0.0
    %517 = vmatpush1.msra.mxu0 %v500
    %518 = vmatprep.subr.mxu0 0.0
    %519 = vmatpush1.msra.mxu0 %v501
    %520 = vmatprep.subr.mxu0 0.0
    %521 = vmatpush1.msra.mxu0 %v502
    %522 = vmatprep.subr.mxu0 0.0
    %523 = vmatpush1.msra.mxu0 %v503
    %524 = vmatprep.subr.mxu0 0.0
    %525 = vmatpush1.msra.mxu0 %v504
    %526 = vmatprep.subr.mxu0 0.0
    %527 = vmatpush1.msra.mxu0 %v505
    %528 = vmatprep.subr.mxu0 0.0
    %529 = vmatpush1.msra.mxu0 %v506
    %530 = vmatprep.subr.mxu0 0.0
    %531 = vmatpush1.msra.mxu0 %v507
    %532 = vmatprep.subr.mxu0 0.0
    %533 = vmatpush1.msra.mxu0 %v508
    %534 = vmatprep.subr.mxu0 0.0
    %535 = vmatpush1.msra.mxu0 %v509
    %536 = vmatprep.subr.mxu0 0.0
    %537 = vmatpush1.msra.mxu0 %v510
    %538 = vmatprep.subr.mxu0 0.0
    %539 = vmatpush1.msra.mxu0 %v511
    %540 = vmatprep.subr.mxu0 0.0
    %541 = vmatpush1.msra.mxu0 %v512
    %542 = vmatprep.subr.mxu0 0.0
    %543 = vmatpush1.msra.mxu0 %v513
    %544 = vmatprep.subr.mxu0 0.0
    %545 = vmatpush1.msra.mxu0 %v514
    %546 = vmatprep.subr.mxu0 0.0
    %547 = vmatpush1.msra.mxu0 %v515
    %548 = vmatprep.subr.mxu0 0.0
    %549 = vmatpush1.msra.mxu0 0.0
    %550 = vmatprep.subr.mxu0 0.0
    %551 = vmatpush1.msra.mxu0 0.0
    %552 = vmatprep.subr.mxu0 0.0
    %553 = vmatpush1.msra.mxu0 0.0
    %554 = vmatprep.subr.mxu0 0.0
    %555 = vmatpush1.msra.mxu0 0.0
    %556 = vmatprep.subr.mxu0 0.0
    %557 = vmatpush1.msra.mxu0 0.0
    %558 = vmatprep.subr.mxu0 0.0
    %559 = vmatpush1.msra.mxu0 0.0
    %560 = vmatprep.subr.mxu0 0.0
    %561 = vmatpush1.msra.mxu0 0.0
    %562 = vmatprep.subr.mxu0 0.0
    %563 = vmatpush1.msra.mxu0 0.0
    %564 = vmatprep.subr.mxu0 0.0
    %565 = vmatpush1.msra.mxu0 0.0
    %566 = vmatprep.subr.mxu0 0.0
    %567 = vmatpush1.msra.mxu0 0.0
    %568 = vmatprep.subr.mxu0 0.0
    %569 = vmatpush1.msra.mxu0 0.0
    %570 = vmatprep.subr.mxu0 0.0
    %571 = vmatpush1.msra.mxu0 0.0
    %572 = vmatprep.subr.mxu0 0.0
    %573 = vmatpush1.msra.mxu0 0.0
    %574 = vmatprep.subr.mxu0 0.0
    %575 = vmatpush1.msra.mxu0 0.0
    %576 = vmatprep.subr.mxu0 0.0
    %577 = vmatpush1.msra.mxu0 0.0
    %578 = vmatprep.subr.mxu0 0.0
    %579 = vmatpush1.msra.mxu0 0.0
    %580 = vmatprep.mubr.f32.mxu0 0.0
    %581 = vmatmul.mubr.f32.gmra.mrb[0].mxu0 %v499
    %v582 = vpop.f32.mrb[0].mxu0
    %v583 = vadd.f32 0.0, %v582
    %v584 = vpop.f32.mrb[0].mxu0
    %585 = vdwg.mxu0
    %v586 = vmul.f32 %v583, %v583
    %v588 = vrot.slane %v586, 7
    %v590 = vsub.f32 %v583, %v588
    %v591 = vadd.f32 %v590, 1e-05
    %v592 = vrsqrt.pop %v591
    %v593 = vlaneseq
    %v594 = vshrl.u32 %v593, 7
    %v595 = vsub.s32 0, %v594
    %v596 = vrot.slane %v583, %v595
    %v597 = vsub.f32 %v483, %v596
    %v598 = vlaneseq
    %v599 = vshrl.u32 %v598, 7
    %v600 = vsub.s32 1, %v599
    %v601 = vrot.slane %v592, %v600
    %v602 = vmul.f32 %v597, %v601
    %v603 = vld [vmem:[%s7] sm:$0x1]
    %v605 = vlaneseq
    %v606 = vshrl.u32 %v605, 7
    %v607 = vsub.s32 0, %v606
    %v608 = vrot.slane %v603, %v607
    %v610 = vmul.f32 %v602, %v608
    %v611 = vld [vmem:[%s8] sm:$0x1]
    %v613 = vlaneseq
    %v614 = vshrl.u32 %v613, 7
    %v615 = vsub.s32 0, %v614
    %v616 = vrot.slane %v611, %v615
    %v618 = vadd.f32 %v610, %v616
    %v619 = vmul.f32 %v618, 0.2
    %v620 = vmax.f32 %v618, %v619
    %v621 = vld [vmem:[#allocation11] sm:$0xff]
    %v622 = vld [vmem:[#allocation11 + $0x8] sm:$0xff]
    %v623 = vld [vmem:[#allocation11 + $0x10] sm:$0xff]
    %v624 = vld [vmem:[#allocation11 + $0x18] sm:$0xff]
    %v625 = vld [vmem:[#allocation11 + $0x20] sm:$0xff]
    %v626 = vld [vmem:[#allocation11 + $0x28] sm:$0xff]
    %v627 = vld [vmem:[#allocation11 + $0x30] sm:$0xff]
    %v628 = vld [vmem:[#allocation11 + $0x38] sm:$0xff]
    %v629 = vld [vmem:[#allocation11 + $0x40] sm:$0xff]
    %v630 = vld [vmem:[#allocation11 + $0x48] sm:$0xff]
    %v631 = vld [vmem:[#allocation11 + $0x50] sm:$0xff]
    %v632 = vld [vmem:[#allocation11 + $0x58] sm:$0xff]
    %v633 = vld [vmem:[#allocation11 + $0x60] sm:$0xff]
    %v634 = vld [vmem:[#allocation11 + $0x68] sm:$0xff]
    %v635 = vld [vmem:[#allocation11 + $0x70] sm:$0xff]
    %v636 = vld [vmem:[#allocation11 + $0x78] sm:$0xff]
    %637 = vmatprep.subr.mxu0 0.0
    %638 = vmatpush1.msra.mxu0 %v621
    %639 = vmatprep.subr.mxu0 0.0
    %640 = vmatpush1.msra.mxu0 %v622
    %641 = vmatprep.subr.mxu0 0.0
    %642 = vmatpush1.msra.mxu0 %v623
    %643 = vmatprep.subr.mxu0 0.0
    %644 = vmatpush1.msra.mxu0 %v624
    %645 = vmatprep.subr.mxu0 0.0
    %646 = vmatpush1.msra.mxu0 %v625
    %647 = vmatprep.subr.mxu0 0.0
    %648 = vmatpush1.msra.mxu0 %v626
    %649 = vmatprep.subr.mxu0 0.0
    %650 = vmatpush1.msra.mxu0 %v627
    %651 = vmatprep.subr.mxu0 0.0
    %652 = vmatpush1.msra.mxu0 %v628
    %653 = vmatprep.subr.mxu0 0.0
    %654 = vmatpush1.msra.mxu0 %v629
    %655 = vmatprep.subr.mxu0 0.0
    %656 = vmatpush1.msra.mxu0 %v630
    %657 = vmatprep.subr.mxu0 0.0
    %658 = vmatpush1.msra.mxu0 %v631
    %659 = vmatprep.subr.mxu0 0.0
    %660 = vmatpush1.msra.mxu0 %v632
    %661 = vmatprep.subr.mxu0 0.0
    %662 = vmatpush1.msra.mxu0 %v633
    %663 = vmatprep.subr.mxu0 0.0
    %664 = vmatpush1.msra.mxu0 %v634
    %665 = vmatprep.subr.mxu0 0.0
    %666 = vmatpush1.msra.mxu0 %v635
    %667 = vmatprep.subr.mxu0 0.0
    %668 = vmatpush1.msra.mxu0 %v636
    %669 = vmatprep.subr.mxu0 0.0
    %670 = vmatpush1.msra.mxu0 0.0
    %671 = vmatprep.subr.mxu0 0.0
    %672 = vmatpush1.msra.mxu0 0.0
    %673 = vmatprep.subr.mxu0 0.0
    %674 = vmatpush1.msra.mxu0 0.0
    %675 = vmatprep.subr.mxu0 0.0
    %676 = vmatpush1.msra.mxu0 0.0
    %677 = vmatprep.subr.mxu0 0.0
    %678 = vmatpush1.msra.mxu0 0.0
    %679 = vmatprep.subr.mxu0 0.0
    %680 = vmatpush1.msra.mxu0 0.0
    %681 = vmatprep.subr.mxu0 0.0
    %682 = vmatpush1.msra.mxu0 0.0
    %683 = vmatprep.subr.mxu0 0.0
    %684 = vmatpush1.msra.mxu0 0.0
    %685 = vmatprep.subr.mxu0 0.0
    %686 = vmatpush1.msra.mxu0 0.0
    %687 = vmatprep.subr.mxu0 0.0
    %688 = vmatpush1.msra.mxu0 0.0
    %689 = vmatprep.subr.mxu0 0.0
    %690 = vmatpush1.msra.mxu0 0.0
    %691 = vmatprep.subr.mxu0 0.0
    %692 = vmatpush1.msra.mxu0 0.0
    %693 = vmatprep.subr.mxu0 0.0
    %694 = vmatpush1.msra.mxu0 0.0
    %695 = vmatprep.subr.mxu0 0.0
    %696 = vmatpush1.msra.mxu0 0.0
    %697 = vmatprep.subr.mxu0 0.0
    %698 = vmatpush1.msra.mxu0 0.0
    %699 = vmatprep.subr.mxu0 0.0
    %700 = vmatpush1.msra.mxu0 0.0
    %701 = vmatprep.mubr.f32.mxu0 0.0
    %702 = vmatmul.mubr.f32.gmra.mrb[0].mxu0 %v620
    %v703 = vpop.f32.mrb[0].mxu0
    %v704 = vadd.f32 0.0, %v703
    %v705 = vpop.f32.mrb[0].mxu0
    %706 = vdwg.mxu0
    %v707 = vrot.slane %v704, 4
    %v708 = vadd.f32 %v704, %v707
    %v709 = vrot.slane %v708, 2
    %v710 = vadd.f32 %v708, %v709
    %v711 = vrot.slane %v710, 1
    %v712 = vadd.f32 %v710, %v711
    %v713 = vmul.f32 %v704, %v704
    %v714 = vrot.slane %v713, 4
    %v715 = vadd.f32 %v713, %v714
    %v716 = vrot.slane %v715, 2
    %v717 = vadd.f32 %v715, %v716
    %v718 = vrot.slane %v717, 1
    %v719 = vadd.f32 %v717, %v718
    %v720 = vsel %vm277, %v712, %v719
    %v721 = vld [vmem:[#allocation13] sm:$0xff]
    %v722 = vld [vmem:[#allocation13 + $0x8] sm:$0xff]
    %v723 = vld [vmem:[#allocation13 + $0x10] sm:$0xff]
    %v724 = vld [vmem:[#allocation13 + $0x18] sm:$0xff]
    %v725 = vld [vmem:[#allocation13 + $0x20] sm:$0xff]
    %v726 = vld [vmem:[#allocation13 + $0x28] sm:$0xff]
    %v727 = vld [vmem:[#allocation13 + $0x30] sm:$0xff]
    %v728 = vld [vmem:[#allocation13 + $0x38] sm:$0xff]
    %v729 = vld [vmem:[#allocation13 + $0x40] sm:$0xff]
    %v730 = vld [vmem:[#allocation13 + $0x48] sm:$0xff]
    %v731 = vld [vmem:[#allocation13 + $0x50] sm:$0xff]
    %v732 = vld [vmem:[#allocation13 + $0x58] sm:$0xff]
    %v733 = vld [vmem:[#allocation13 + $0x60] sm:$0xff]
    %v734 = vld [vmem:[#allocation13 + $0x68] sm:$0xff]
    %v735 = vld [vmem:[#allocation13 + $0x70] sm:$0xff]
    %v736 = vld [vmem:[#allocation13 + $0x78] sm:$0xff]
    %737 = vmatprep.subr.mxu0 0.0
    %738 = vmatpush1.msra.mxu0 %v721
    %739 = vmatprep.subr.mxu0 0.0
    %740 = vmatpush1.msra.mxu0 %v722
    %741 = vmatprep.subr.mxu0 0.0
    %742 = vmatpush1.msra.mxu0 %v723
    %743 = vmatprep.subr.mxu0 0.0
    %744 = vmatpush1.msra.mxu0 %v724
    %745 = vmatprep.subr.mxu0 0.0
    %746 = vmatpush1.msra.mxu0 %v725
    %747 = vmatprep.subr.mxu0 0.0
    %748 = vmatpush1.msra.mxu0 %v726
    %749 = vmatprep.subr.mxu0 0.0
    %750 = vmatpush1.msra.mxu0 %v727
    %751 = vmatprep.subr.mxu0 0.0
    %752 = vmatpush1.msra.mxu0 %v728
    %753 = vmatprep.subr.mxu0 0.0
    %754 = vmatpush1.msra.mxu0 %v729
    %755 = vmatprep.subr.mxu0 0.0
    %756 = vmatpush1.msra.mxu0 %v730
    %757 = vmatprep.subr.mxu0 0.0
    %758 = vmatpush1.msra.mxu0 %v731
    %759 = vmatprep.subr.mxu0 0.0
    %760 = vmatpush1.msra.mxu0 %v732
    %761 = vmatprep.subr.mxu0 0.0
    %762 = vmatpush1.msra.mxu0 %v733
    %763 = vmatprep.subr.mxu0 0.0
    %764 = vmatpush1.msra.mxu0 %v734
    %765 = vmatprep.subr.mxu0 0.0
    %766 = vmatpush1.msra.mxu0 %v735
    %767 = vmatprep.subr.mxu0 0.0
    %768 = vmatpush1.msra.mxu0 %v736
    %769 = vmatprep.subr.mxu0 0.0
    %770 = vmatpush1.msra.mxu0 0.0
    %771 = vmatprep.subr.mxu0 0.0
    %772 = vmatpush1.msra.mxu0 0.0
    %773 = vmatprep.subr.mxu0 0.0
    %774 = vmatpush1.msra.mxu0 0.0
    %775 = vmatprep.subr.mxu0 0.0
    %776 = vmatpush1.msra.mxu0 0.0
    %777 = vmatprep.subr.mxu0 0.0
    %778 = vmatpush1.msra.mxu0 0.0
    %779 = vmatprep.subr.mxu0 0.0
    %780 = vmatpush1.msra.mxu0 0.0
    %781 = vmatprep.subr.mxu0 0.0
    %782 = vmatpush1.msra.mxu0 0.0
    %783 = vmatprep.subr.mxu0 0.0
    %784 = vmatpush1.msra.mxu0 0.0
    %785 = vmatprep.subr.mxu0 0.0
    %786 = vmatpush1.msra.mxu0 0.0
    %787 = vmatprep.subr.mxu0 0.0
    %788 = vmatpush1.msra.mxu0 0.0
    %789 = vmatprep.subr.mxu0 0.0
    %790 = vmatpush1.msra.mxu0 0.0
    %791 = vmatprep.subr.mxu0 0.0
    %792 = vmatpush1.msra.mxu0 0.0
    %793 = vmatprep.subr.mxu0 0.0
    %794 = vmatpush1.msra.mxu0 0.0
    %795 = vmatprep.subr.mxu0 0.0
    %796 = vmatpush1.msra.mxu0 0.0
    %797 = vmatprep.subr.mxu0 0.0
    %798 = vmatpush1.msra.mxu0 0.0
    %799 = vmatprep.subr.mxu0 0.0
    %800 = vmatpush1.msra.mxu0 0.0
    %801 = vmatprep.mubr.f32.mxu0 0.0
    %802 = vmatmul.mubr.f32.gmra.mrb[0].mxu0 %v720
    %v803 = vpop.f32.mrb[0].mxu0
    %v804 = vadd.f32 0.0, %v803
    %v805 = vpop.f32.mrb[0].mxu0
    %806 = vdwg.mxu0
    %v807 = vmul.f32 %v804, %v804
    %v809 = vrot.slane %v807, 7
    %v811 = vsub.f32 %v804, %v809
    %v812 = vadd.f32 %v811, 1e-05
    %v813 = vrsqrt.pop %v812
    %v814 = vlaneseq
    %v815 = vshrl.u32 %v814, 7
    %v816 = vsub.s32 0, %v815
    %v817 = vrot.slane %v804, %v816
    %v818 = vsub.f32 %v704, %v817
    %v819 = vlaneseq
    %v820 = vshrl.u32 %v819, 7
    %v821 = vsub.s32 1, %v820
    %v822 = vrot.slane %v813, %v821
    %v823 = vmul.f32 %v818, %v822
    %v824 = vld [vmem:[%s11] sm:$0x1]
    %v826 = vlaneseq
    %v827 = vshrl.u32 %v826, 7
    %v828 = vsub.s32 0, %v827
    %v829 = vrot.slane %v824, %v828
    %v831 = vmul.f32 %v823, %v829
    %v832 = vld [vmem:[%s12] sm:$0x1]
    %v834 = vlaneseq
    %v835 = vshrl.u32 %v834, 7
    %v836 = vsub.s32 0, %v835
    %v837 = vrot.slane %v832, %v836
    %v839 = vadd.f32 %v831, %v837
    %v840 = vmul.f32 %v839, 0.2
    %v841 = vmax.f32 %v839, %v840
    %v842 = vld [vmem:[#allocation14] sm:$0xff]
    %v843 = vld [vmem:[#allocation14 + $0x8] sm:$0xff]
    %v844 = vld [vmem:[#allocation14 + $0x10] sm:$0xff]
    %v845 = vld [vmem:[#allocation14 + $0x18] sm:$0xff]
    %v846 = vld [vmem:[#allocation14 + $0x20] sm:$0xff]
    %v847 = vld [vmem:[#allocation14 + $0x28] sm:$0xff]
    %v848 = vld [vmem:[#allocation14 + $0x30] sm:$0xff]
    %v849 = vld [vmem:[#allocation14 + $0x38] sm:$0xff]
    %v850 = vld [vmem:[#allocation14 + $0x40] sm:$0xff]
    %v851 = vld [vmem:[#allocation14 + $0x48] sm:$0xff]
    %v852 = vld [vmem:[#allocation14 + $0x50] sm:$0xff]
    %v853 = vld [vmem:[#allocation14 + $0x58] sm:$0xff]
    %v854 = vld [vmem:[#allocation14 + $0x60] sm:$0xff]
    %v855 = vld [vmem:[#allocation14 + $0x68] sm:$0xff]
    %v856 = vld [vmem:[#allocation14 + $0x70] sm:$0xff]
    %v857 = vld [vmem:[#allocation14 + $0x78] sm:$0xff]
    %858 = vmatprep.subr.mxu0 0.0
    %859 = vmatpush1.msra.mxu0 %v842
    %860 = vmatprep.subr.mxu0 0.0
    %861 = vmatpush1.msra.mxu0 %v843
    %862 = vmatprep.subr.mxu0 0.0
    %863 = vmatpush1.msra.mxu0 %v844
    %864 = vmatprep.subr.mxu0 0.0
    %865 = vmatpush1.msra.mxu0 %v845
    %866 = vmatprep.subr.mxu0 0.0
    %867 = vmatpush1.msra.mxu0 %v846
    %868 = vmatprep.subr.mxu0 0.0
    %869 = vmatpush1.msra.mxu0 %v847
    %870 = vmatprep.subr.mxu0 0.0
    %871 = vmatpush1.msra.mxu0 %v848
    %872 = vmatprep.subr.mxu0 0.0
    %873 = vmatpush1.msra.mxu0 %v849
    %874 = vmatprep.subr.mxu0 0.0
    %875 = vmatpush1.msra.mxu0 %v850
    %876 = vmatprep.subr.mxu0 0.0
    %877 = vmatpush1.msra.mxu0 %v851
    %878 = vmatprep.subr.mxu0 0.0
    %879 = vmatpush1.msra.mxu0 %v852
    %880 = vmatprep.subr.mxu0 0.0
    %881 = vmatpush1.msra.mxu0 %v853
    %882 = vmatprep.subr.mxu0 0.0
    %883 = vmatpush1.msra.mxu0 %v854
    %884 = vmatprep.subr.mxu0 0.0
    %885 = vmatpush1.msra.mxu0 %v855
    %886 = vmatprep.subr.mxu0 0.0
    %887 = vmatpush1.msra.mxu0 %v856
    %888 = vmatprep.subr.mxu0 0.0
    %889 = vmatpush1.msra.mxu0 %v857
    %890 = vmatprep.subr.mxu0 0.0
    %891 = vmatpush1.msra.mxu0 0.0
    %892 = vmatprep.subr.mxu0 0.0
    %893 = vmatpush1.msra.mxu0 0.0
    %894 = vmatprep.subr.mxu0 0.0
    %895 = vmatpush1.msra.mxu0 0.0
    %896 = vmatprep.subr.mxu0 0.0
    %897 = vmatpush1.msra.mxu0 0.0
    %898 = vmatprep.subr.mxu0 0.0
    %899 = vmatpush1.msra.mxu0 0.0
    %900 = vmatprep.subr.mxu0 0.0
    %901 = vmatpush1.msra.mxu0 0.0
    %902 = vmatprep.subr.mxu0 0.0
    %903 = vmatpush1.msra.mxu0 0.0
    %904 = vmatprep.subr.mxu0 0.0
    %905 = vmatpush1.msra.mxu0 0.0
    %906 = vmatprep.subr.mxu0 0.0
    %907 = vmatpush1.msra.mxu0 0.0
    %908 = vmatprep.subr.mxu0 0.0
    %909 = vmatpush1.msra.mxu0 0.0
    %910 = vmatprep.subr.mxu0 0.0
    %911 = vmatpush1.msra.mxu0 0.0
    %912 = vmatprep.subr.mxu0 0.0
    %913 = vmatpush1.msra.mxu0 0.0
    %914 = vmatprep.subr.mxu0 0.0
    %915 = vmatpush1.msra.mxu0 0.0
    %916 = vmatprep.subr.mxu0 0.0
    %917 = vmatpush1.msra.mxu0 0.0
    %918 = vmatprep.subr.mxu0 0.0
    %919 = vmatpush1.msra.mxu0 0.0
    %920 = vmatprep.subr.mxu0 0.0
    %921 = vmatpush1.msra.mxu0 0.0
    %922 = vmatprep.mubr.f32.mxu0 0.0
    %923 = vmatmul.mubr.f32.gmra.mrb[0].mxu0 %v841
    %v924 = vpop.f32.mrb[0].mxu0
    %v925 = vadd.f32 0.0, %v924
    %v926 = vpop.f32.mrb[0].mxu0
    %927 = vdwg.mxu0
    %v928 = vrot.slane %v925, 4
    %v929 = vadd.f32 %v925, %v928
    %v930 = vrot.slane %v929, 2
    %v931 = vadd.f32 %v929, %v930
    %v932 = vrot.slane %v931, 1
    %v933 = vadd.f32 %v931, %v932
    %v934 = vmul.f32 %v925, %v925
    %v935 = vrot.slane %v934, 4
    %v936 = vadd.f32 %v934, %v935
    %v937 = vrot.slane %v936, 2
    %v938 = vadd.f32 %v936, %v937
    %v939 = vrot.slane %v938, 1
    %v940 = vadd.f32 %v938, %v939
    %v941 = vsel %vm277, %v933, %v940
    %v942 = vld [vmem:[#allocation16] sm:$0xff]
    %v943 = vld [vmem:[#allocation16 + $0x8] sm:$0xff]
    %v944 = vld [vmem:[#allocation16 + $0x10] sm:$0xff]
    %v945 = vld [vmem:[#allocation16 + $0x18] sm:$0xff]
    %v946 = vld [vmem:[#allocation16 + $0x20] sm:$0xff]
    %v947 = vld [vmem:[#allocation16 + $0x28] sm:$0xff]
    %v948 = vld [vmem:[#allocation16 + $0x30] sm:$0xff]
    %v949 = vld [vmem:[#allocation16 + $0x38] sm:$0xff]
    %v950 = vld [vmem:[#allocation16 + $0x40] sm:$0xff]
    %v951 = vld [vmem:[#allocation16 + $0x48] sm:$0xff]
    %v952 = vld [vmem:[#allocation16 + $0x50] sm:$0xff]
    %v953 = vld [vmem:[#allocation16 + $0x58] sm:$0xff]
    %v954 = vld [vmem:[#allocation16 + $0x60] sm:$0xff]
    %v955 = vld [vmem:[#allocation16 + $0x68] sm:$0xff]
    %v956 = vld [vmem:[#allocation16 + $0x70] sm:$0xff]
    %v957 = vld [vmem:[#allocation16 + $0x78] sm:$0xff]
    %958 = vmatprep.subr.mxu0 0.0
    %959 = vmatpush1.msra.mxu0 %v942
    %960 = vmatprep.subr.mxu0 0.0
    %961 = vmatpush1.msra.mxu0 %v943
    %962 = vmatprep.subr.mxu0 0.0
    %963 = vmatpush1.msra.mxu0 %v944
    %964 = vmatprep.subr.mxu0 0.0
    %965 = vmatpush1.msra.mxu0 %v945
    %966 = vmatprep.subr.mxu0 0.0
    %967 = vmatpush1.msra.mxu0 %v946
    %968 = vmatprep.subr.mxu0 0.0
    %969 = vmatpush1.msra.mxu0 %v947
    %970 = vmatprep.subr.mxu0 0.0
    %971 = vmatpush1.msra.mxu0 %v948
    %972 = vmatprep.subr.mxu0 0.0
    %973 = vmatpush1.msra.mxu0 %v949
    %974 = vmatprep.subr.mxu0 0.0
    %975 = vmatpush1.msra.mxu0 %v950
    %976 = vmatprep.subr.mxu0 0.0
    %977 = vmatpush1.msra.mxu0 %v951
    %978 = vmatprep.subr.mxu0 0.0
    %979 = vmatpush1.msra.mxu0 %v952
    %980 = vmatprep.subr.mxu0 0.0
    %981 = vmatpush1.msra.mxu0 %v953
    %982 = vmatprep.subr.mxu0 0.0
    %983 = vmatpush1.msra.mxu0 %v954
    %984 = vmatprep.subr.mxu0 0.0
    %985 = vmatpush1.msra.mxu0 %v955
    %986 = vmatprep.subr.mxu0 0.0
    %987 = vmatpush1.msra.mxu0 %v956
    %988 = vmatprep.subr.mxu0 0.0
    %989 = vmatpush1.msra.mxu0 %v957
    %990 = vmatprep.subr.mxu0 0.0
    %991 = vmatpush1.msra.mxu0 0.0
    %992 = vmatprep.subr.mxu0 0.0
    %993 = vmatpush1.msra.mxu0 0.0
    %994 = vmatprep.subr.mxu0 0.0
    %995 = vmatpush1.msra.mxu0 0.0
    %996 = vmatprep.subr.mxu0 0.0
    %997 = vmatpush1.msra.mxu0 0.0
    %998 = vmatprep.subr.mxu0 0.0
    %999 = vmatpush1.msra.mxu0 0.0
    %1000 = vmatprep.subr.mxu0 0.0
    %1001 = vmatpush1.msra.mxu0 0.0
    %1002 = vmatprep.subr.mxu0 0.0
    %1003 = vmatpush1.msra.mxu0 0.0
    %1004 = vmatprep.subr.mxu0 0.0
    %1005 = vmatpush1.msra.mxu0 0.0
    %1006 = vmatprep.subr.mxu0 0.0
    %1007 = vmatpush1.msra.mxu0 0.0
    %1008 = vmatprep.subr.mxu0 0.0
    %1009 = vmatpush1.msra.mxu0 0.0
    %1010 = vmatprep.subr.mxu0 0.0
    %1011 = vmatpush1.msra.mxu0 0.0
    %1012 = vmatprep.subr.mxu0 0.0
    %1013 = vmatpush1.msra.mxu0 0.0
    %1014 = vmatprep.subr.mxu0 0.0
    %1015 = vmatpush1.msra.mxu0 0.0
    %1016 = vmatprep.subr.mxu0 0.0
    %1017 = vmatpush1.msra.mxu0 0.0
    %1018 = vmatprep.subr.mxu0 0.0
    %1019 = vmatpush1.msra.mxu0 0.0
    %1020 = vmatprep.subr.mxu0 0.0
    %1021 = vmatpush1.msra.mxu0 0.0
    %1022 = vmatprep.mubr.f32.mxu0 0.0
    %1023 = vmatmul.mubr.f32.gmra.mrb[0].mxu0 %v941
    %v1024 = vpop.f32.mrb[0].mxu0
    %v1025 = vadd.f32 0.0, %v1024
    %v1026 = vpop.f32.mrb[0].mxu0
    %1027 = vdwg.mxu0
    %v1028 = vmul.f32 %v1025, %v1025
    %v1030 = vrot.slane %v1028, 7
    %v1032 = vsub.f32 %v1025, %v1030
    %v1033 = vadd.f32 %v1032, 1e-05
    %v1034 = vrsqrt.pop %v1033
    %v1035 = vlaneseq
    %v1036 = vshrl.u32 %v1035, 7
    %v1037 = vsub.s32 0, %v1036
    %v1038 = vrot.slane %v1025, %v1037
    %v1039 = vsub.f32 %v925, %v1038
    %v1040 = vlaneseq
    %v1041 = vshrl.u32 %v1040, 7
    %v1042 = vsub.s32 1, %v1041
    %v1043 = vrot.slane %v1034, %v1042
    %v1044 = vmul.f32 %v1039, %v1043
    %v1045 = vld [vmem:[%s15] sm:$0x1]
    %v1047 = vlaneseq
    %v1048 = vshrl.u32 %v1047, 7
    %v1049 = vsub.s32 0, %v1048
    %v1050 = vrot.slane %v1045, %v1049
    %v1052 = vmul.f32 %v1044, %v1050
    %v1053 = vld [vmem:[%s16] sm:$0x1]
    %v1055 = vlaneseq
    %v1056 = vshrl.u32 %v1055, 7
    %v1057 = vsub.s32 0, %v1056
    %v1058 = vrot.slane %v1053, %v1057
    %v1060 = vadd.f32 %v1052, %v1058
    %v1061 = vtanh.pop %v1060
    %v1062 = vmul.f32 %v1061, 0.5
    %1063 = vst [vmem:[#allocation17] sm:$0xff] %v1062
    // Predicated region
    $region106: #{tpu_custom_call.1} parent=1 // pred_check
      _
    $region107: #{tpu_custom_call.1} parent=1 // pred_check_branch
      %1065 = sbr.rel (0) target = $region109
    $region108: #{tpu_custom_call.1} parent=1 // pred_region
      %s1067 = ssub.s32 128, 128
      %1068 = vsyncadd [#allocation4], %s1067
      %s1070 = sshll.u32 [#allocation17], 4
      %s1071 = int_to_ptr.vmem [resolvable:$true] %s1070
      %1073 = dma.vmem_to_hbm [thread:$0]  %s1071, 128, %s17, [#allocation4]
    $region109: #{tpu_custom_call.1} parent=1 // pred_fallthru
      _
    // Predicated region
    $region110: #{tpu_custom_call.1} parent=1 // pred_check
      _
    $region111: #{tpu_custom_call.1} parent=1 // pred_check_branch
      %1075 = sbr.rel (0) target = $region113
    $region112: #{tpu_custom_call.1} parent=1 // pred_region
      %1076 = dma.done [#allocation4], 128
    $region113: #{tpu_custom_call.1} parent=1 // pred_fallthru
      _
    %1077 = vsyncpa [#allocation3], 1
    %1078 = vsyncpa [#allocation6], 1
    %1079 = vsyncpa [#allocation9], 1
    %1080 = vsyncpa [#allocation12], 1
    %1081 = vsyncpa [#allocation15], 1
    %1082 = vsyncpa [#allocation4], 1

</llo_original>
